<compile_context>
chip_gen: v5e
topology: v5e:2x2
jax: 0.10.0
libtpu: 0.0.40
codegen_flags: <defaults>
</compile_context>

<pallas_src>
import numpy as np
import jax
import jax.numpy as jnp
from jax import lax
from jax.experimental import pallas as pl
from jax.experimental.pallas import tpu as pltpu


def _upsample_kernel(x_ref, w_ref, b_ref, o_ref, xp_ref):
    # x_ref : (H, W, C)       input tile for batch n (batch dim squeezed)
    # w_ref : (4, 4C, C)      fused sub-kernel weights, parity-major, resident
    # b_ref : (1, C)          bias
    # o_ref : (H, 2, W, 2C)   interleave-ready output: o[t, a, s, b*C + c]
    # xp_ref: (H+2, W+2, C)   VMEM scratch holding the zero-padded input
    H, W, C = x_ref.shape

    # Build the 1-padded tile in VMEM (replaces a full HBM read+write pad pass
    # in the wrapper).  Zeroed every step so it is safe if the parallel batch
    # axis is sharded across cores; the extra VMEM writes are cheap.
    xp_ref[...] = jnp.zeros_like(xp_ref)
    xp_ref[1:H + 1, 1:W + 1, :] = x_ref[...]

    # 9 unique shifted (H, W, C) views of the padded tile, loaded once each.
    taps = [[xp_ref[i:i + H, j:j + W, :] for j in range(3)] for i in range(3)]

    bias = b_ref[...]                                    # (1, C), broadcasts
    for a in range(2):                                   # output row parity
        for b in range(2):                               # output col parity
            p = 2 * a + b
            # Fuse the 2x2 taps of this parity into one K=4C MXU matmul.
            patch = jnp.concatenate(
                [taps[a + dh][b + dw] for dh in range(2) for dw in range(2)],
                axis=-1).reshape(H * W, 4 * C)
            acc = jnp.dot(patch, w_ref[p],
                          preferred_element_type=jnp.float32) + bias
            # y[n, 2t+a, 2s+b, c]  <->  o[t, a, s, b*C + c]
            o_ref[:, a, :, b * C:(b + 1) * C] = (
                acc.reshape(H, W, C).astype(o_ref.dtype))


def _build_fused_weights(weight):
    # weight: (Cin, Cout, 4, 4) -- torch ConvTranspose2d layout.
    # Returns (4, 4*Cin, Cout); parity index p = 2*a + b, row = tap*Cin + ci
    # with tap = 2*dh + dw.  Derivation: ho = 2*ih - 1 + kh, so for ho = 2t+a
    # the contributing taps are kh = 3 - a - 2*dh at padded input row t+a+dh.
    subs = []
    for a in range(2):
        for b in range(2):
            taps = []
            for dh in range(2):
                for dw in range(2):
                    kh = 3 - a - 2 * dh
                    kw = 3 - b - 2 * dw
                    taps.append(weight[:, :, kh, kw])      # (Cin, Cout)
            subs.append(jnp.concatenate(taps, axis=0))     # (4*Cin, Cout)
    return jnp.stack(subs, axis=0)                         # (4, 4*Cin, Cout)


def upsample(x_nchw, weight, bias):
    """ConvTranspose2d(dim, dim, 4, 2, 1): (N, C, H, W) -> (N, C, 2H, 2W)."""
    N, C, H, W = x_nchw.shape
    x = jnp.transpose(x_nchw, (0, 2, 3, 1))                # NHWC (lanes = C)
    w_fused = _build_fused_weights(weight)                 # (4, 4C, C)
    bias2 = bias.reshape(1, C)

    out = pl.pallas_call(
        _upsample_kernel,
        out_shape=jax.ShapeDtypeStruct((N, H, 2, W, 2 * C), x.dtype),
        grid_spec=pltpu.PrefetchScalarGridSpec(
            num_scalar_prefetch=0,
            grid=(N,),
            in_specs=[
                pl.BlockSpec((None, H, W, C), lambda n: (n, 0, 0, 0)),
                pl.BlockSpec((4, 4 * C, C), lambda n: (0, 0, 0)),   # resident
                pl.BlockSpec((1, C), lambda n: (0, 0)),             # resident
            ],
            out_specs=pl.BlockSpec((None, H, 2, W, 2 * C),
                                   lambda n: (n, 0, 0, 0, 0)),
            scratch_shapes=[pltpu.VMEM((H + 2, W + 2, C), x.dtype)],
        ),
        compiler_params=pltpu.CompilerParams(
            dimension_semantics=("parallel",),
            vmem_limit_bytes=48 * 1024 * 1024),
    )(x, w_fused, bias2)

    # out[n, t, a, s, b*C + c] -> y[n, 2t+a, 2s+b, c]: zero-copy reshape.
    y = out.reshape(N, 2 * H, 2 * W, C)
    return jnp.transpose(y, (0, 3, 1, 2))                  # back to NCHW


def reference(x_nchw, weight, bias):
    # ConvTranspose2d == conv with lhs_dilation=stride, padding=k-1-p,
    # kernel spatially flipped and in/out channels transposed.
    w_conv = jnp.transpose(weight[:, :, ::-1, ::-1], (1, 0, 2, 3))  # (Cout,Cin,4,4)
    y = lax.conv_general_dilated(
        x_nchw, w_conv, window_strides=(1, 1), padding=[(2, 2), (2, 2)],
        lhs_dilation=(2, 2), dimension_numbers=("NCHW", "OIHW", "NCHW"))
    return y + bias.reshape(1, -1, 1, 1)


if __name__ == "__main__":
    key = jax.random.PRNGKey(0)
    k1, k2, k3 = jax.random.split(key, 3)
    N, dim, H, W = 2, 8, 16, 16

    x = jax.random.normal(k1, (N, dim, H, W), jnp.float32)
    # Deterministic parameter init (torch default: U(-1/sqrt(fan_in), 1/sqrt(fan_in)))
    bound = 1.0 / float(np.sqrt(dim * 4 * 4))
    weight = jax.random.uniform(k2, (dim, dim, 4, 4), jnp.float32, -bound, bound)
    bias = jax.random.uniform(k3, (dim,), jnp.float32, -bound, bound)

    y = jax.block_until_ready(upsample(x, weight, bias))
    assert y.shape == (N, dim, 2 * H, 2 * W)

    y_ref = reference(x, weight, bias)
    np.testing.assert_allclose(np.asarray(y), np.asarray(y_ref),
                               rtol=1e-5, atol=1e-5)
    print("KERNEL_OK")
</pallas_src>

<mosaic_0001>
module attributes {stable_mosaic.version = 11 : i64} {
  func.func @_upsample_kernel(%arg0: i32, %arg1: memref<1x16x16x8xf32, #tpu.memory_space<vmem>>, %arg2: memref<4x32x8xf32, #tpu.memory_space<vmem>>, %arg3: memref<1x8xf32, #tpu.memory_space<vmem>>, %arg4: memref<1x16x2x16x16xf32, #tpu.memory_space<vmem>>, %arg5: memref<18x18x8xf32, #tpu.memory_space<vmem>>) attributes {dimension_semantics = [#tpu.dimension_semantics<parallel>], iteration_bounds = array<i64: 2>, scalar_prefetch = 0 : i64, scratch_operands = 1 : i64, tpu.core_type = #tpu.core_type<tc>, window_params = [{transform_indices = @transform_0, window_bounds = array<i64: 1, 16, 16, 8>}, {pipeline_mode = #tpu.pipeline_mode<synchronous>, transform_indices = @transform_1, window_bounds = array<i64: 4, 32, 8>}, {pipeline_mode = #tpu.pipeline_mode<synchronous>, transform_indices = @transform_2, window_bounds = array<i64: 1, 8>}, {transform_indices = @transform_3, window_bounds = array<i64: 1, 16, 2, 16, 16>}]} {
    %cst = arith.constant 0.000000e+00 : f32
    %0 = vector.broadcast %cst : f32 to vector<18x18x8xf32>
    %c0 = arith.constant 0 : index
    %c0_0 = arith.constant 0 : index
    %c0_1 = arith.constant 0 : index
    %1 = vector.load %arg5[%c0, %c0_0, %c0_1] : memref<18x18x8xf32, #tpu.memory_space<vmem>>, vector<18x18x8xf32>
    tpu.vector_store %arg5[%c0, %c0_0, %c0_1], %0 {strides = array<i32>} : memref<18x18x8xf32, #tpu.memory_space<vmem>>, vector<18x18x8xf32>,
    %c0_2 = arith.constant 0 : index
    %c0_3 = arith.constant 0 : index
    %c0_4 = arith.constant 0 : index
    %c0_5 = arith.constant 0 : index
    %2 = vector.load %arg1[%c0_2, %c0_3, %c0_4, %c0_5] : memref<1x16x16x8xf32, #tpu.memory_space<vmem>>, vector<1x16x16x8xf32>
    %3 = vector.shape_cast %2 : vector<1x16x16x8xf32> to vector<16x16x8xf32>
    %c1 = arith.constant 1 : index
    %c1_6 = arith.constant 1 : index
    %c0_7 = arith.constant 0 : index
    %4 = vector.load %arg5[%c1, %c1_6, %c0_7] : memref<18x18x8xf32, #tpu.memory_space<vmem>>, vector<16x16x8xf32>
    tpu.vector_store %arg5[%c1, %c1_6, %c0_7], %3 {strides = array<i32>} : memref<18x18x8xf32, #tpu.memory_space<vmem>>, vector<16x16x8xf32>,
    %c0_8 = arith.constant 0 : index
    %c0_9 = arith.constant 0 : index
    %c0_10 = arith.constant 0 : index
    %5 = vector.load %arg5[%c0_8, %c0_9, %c0_10] : memref<18x18x8xf32, #tpu.memory_space<vmem>>, vector<16x16x8xf32>
    %c0_11 = arith.constant 0 : index
    %c1_12 = arith.constant 1 : index
    %c0_13 = arith.constant 0 : index
    %6 = vector.load %arg5[%c0_11, %c1_12, %c0_13] : memref<18x18x8xf32, #tpu.memory_space<vmem>>, vector<16x16x8xf32>
    %c0_14 = arith.constant 0 : index
    %c2 = arith.constant 2 : index
    %c0_15 = arith.constant 0 : index
    %7 = vector.load %arg5[%c0_14, %c2, %c0_15] : memref<18x18x8xf32, #tpu.memory_space<vmem>>, vector<16x16x8xf32>
    %c1_16 = arith.constant 1 : index
    %c0_17 = arith.constant 0 : index
    %c0_18 = arith.constant 0 : index
    %8 = vector.load %arg5[%c1_16, %c0_17, %c0_18] : memref<18x18x8xf32, #tpu.memory_space<vmem>>, vector<16x16x8xf32>
    %c1_19 = arith.constant 1 : index
    %c1_20 = arith.constant 1 : index
    %c0_21 = arith.constant 0 : index
    %9 = vector.load %arg5[%c1_19, %c1_20, %c0_21] : memref<18x18x8xf32, #tpu.memory_space<vmem>>, vector<16x16x8xf32>
    %c1_22 = arith.constant 1 : index
    %c2_23 = arith.constant 2 : index
    %c0_24 = arith.constant 0 : index
    %10 = vector.load %arg5[%c1_22, %c2_23, %c0_24] : memref<18x18x8xf32, #tpu.memory_space<vmem>>, vector<16x16x8xf32>
    %c2_25 = arith.constant 2 : index
    %c0_26 = arith.constant 0 : index
    %c0_27 = arith.constant 0 : index
    %11 = vector.load %arg5[%c2_25, %c0_26, %c0_27] : memref<18x18x8xf32, #tpu.memory_space<vmem>>, vector<16x16x8xf32>
    %c2_28 = arith.constant 2 : index
    %c1_29 = arith.constant 1 : index
    %c0_30 = arith.constant 0 : index
    %12 = vector.load %arg5[%c2_28, %c1_29, %c0_30] : memref<18x18x8xf32, #tpu.memory_space<vmem>>, vector<16x16x8xf32>
    %c2_31 = arith.constant 2 : index
    %c2_32 = arith.constant 2 : index
    %c0_33 = arith.constant 0 : index
    %13 = vector.load %arg5[%c2_31, %c2_32, %c0_33] : memref<18x18x8xf32, #tpu.memory_space<vmem>>, vector<16x16x8xf32>
    %c0_34 = arith.constant 0 : index
    %c0_35 = arith.constant 0 : index
    %14 = vector.load %arg3[%c0_34, %c0_35] : memref<1x8xf32, #tpu.memory_space<vmem>>, vector<1x8xf32>
    %15 = tpu.concatenate %5, %6, %8, %9 in 2 : vector<16x16x8xf32>, vector<16x16x8xf32>, vector<16x16x8xf32>, vector<16x16x8xf32> -> vector<16x16x32xf32>
    %16 = vector.shape_cast %15 : vector<16x16x32xf32> to vector<256x32xf32>
    %c0_36 = arith.constant 0 : index
    %c0_37 = arith.constant 0 : index
    %c0_38 = arith.constant 0 : index
    %17 = vector.load %arg2[%c0_36, %c0_37, %c0_38] : memref<4x32x8xf32, #tpu.memory_space<vmem>>, vector<1x32x8xf32>
    %18 = vector.shape_cast %17 : vector<1x32x8xf32> to vector<32x8xf32>
    %cst_39 = arith.constant dense<0.000000e+00> : vector<256x8xf32>
    %19 = tpu.matmul %16, %18, %cst_39 {dimension_numbers = #tpu.dot_dimension_numbers<[1], [0], [0], [1], [0, 0, 1, 1], [], []>} : vector<256x32xf32>, vector<32x8xf32>, vector<256x8xf32> -> vector<256x8xf32>
    %20 = vector.broadcast %14 : vector<1x8xf32> to vector<256x8xf32>
    %21 = arith.addf %19, %20 : vector<256x8xf32>
    %22 = vector.shape_cast %21 : vector<256x8xf32> to vector<16x16x8xf32>
    %c0_40 = arith.constant 0 : index
    %c0_41 = arith.constant 0 : index
    %c0_42 = arith.constant 0 : index
    %c0_43 = arith.constant 0 : index
    %c0_44 = arith.constant 0 : index
    %23 = vector.load %arg4[%c0_40, %c0_41, %c0_42, %c0_43, %c0_44] : memref<1x16x2x16x16xf32, #tpu.memory_space<vmem>>, vector<1x16x1x16x8xf32>
    %24 = vector.shape_cast %23 : vector<1x16x1x16x8xf32> to vector<16x16x8xf32>
    %25 = vector.shape_cast %22 : vector<16x16x8xf32> to vector<1x16x1x16x8xf32>
    tpu.vector_store %arg4[%c0_40, %c0_41, %c0_42, %c0_43, %c0_44], %25 {strides = array<i32>} : memref<1x16x2x16x16xf32, #tpu.memory_space<vmem>>, vector<1x16x1x16x8xf32>,
    %26 = tpu.concatenate %6, %7, %9, %10 in 2 : vector<16x16x8xf32>, vector<16x16x8xf32>, vector<16x16x8xf32>, vector<16x16x8xf32> -> vector<16x16x32xf32>
    %27 = vector.shape_cast %26 : vector<16x16x32xf32> to vector<256x32xf32>
    %c1_45 = arith.constant 1 : index
    %c0_46 = arith.constant 0 : index
    %c0_47 = arith.constant 0 : index
    %28 = vector.load %arg2[%c1_45, %c0_46, %c0_47] : memref<4x32x8xf32, #tpu.memory_space<vmem>>, vector<1x32x8xf32>
    %29 = vector.shape_cast %28 : vector<1x32x8xf32> to vector<32x8xf32>
    %cst_48 = arith.constant dense<0.000000e+00> : vector<256x8xf32>
    %30 = tpu.matmul %27, %29, %cst_48 {dimension_numbers = #tpu.dot_dimension_numbers<[1], [0], [0], [1], [0, 0, 1, 1], [], []>} : vector<256x32xf32>, vector<32x8xf32>, vector<256x8xf32> -> vector<256x8xf32>
    %31 = vector.broadcast %14 : vector<1x8xf32> to vector<256x8xf32>
    %32 = arith.addf %30, %31 : vector<256x8xf32>
    %33 = vector.shape_cast %32 : vector<256x8xf32> to vector<16x16x8xf32>
    %c0_49 = arith.constant 0 : index
    %c0_50 = arith.constant 0 : index
    %c0_51 = arith.constant 0 : index
    %c0_52 = arith.constant 0 : index
    %c8 = arith.constant 8 : index
    %34 = vector.load %arg4[%c0_49, %c0_50, %c0_51, %c0_52, %c8] : memref<1x16x2x16x16xf32, #tpu.memory_space<vmem>>, vector<1x16x1x16x8xf32>
    %35 = vector.shape_cast %34 : vector<1x16x1x16x8xf32> to vector<16x16x8xf32>
    %36 = vector.shape_cast %33 : vector<16x16x8xf32> to vector<1x16x1x16x8xf32>
    tpu.vector_store %arg4[%c0_49, %c0_50, %c0_51, %c0_52, %c8], %36 {strides = array<i32>} : memref<1x16x2x16x16xf32, #tpu.memory_space<vmem>>, vector<1x16x1x16x8xf32>,
    %37 = tpu.concatenate %8, %9, %11, %12 in 2 : vector<16x16x8xf32>, vector<16x16x8xf32>, vector<16x16x8xf32>, vector<16x16x8xf32> -> vector<16x16x32xf32>
    %38 = vector.shape_cast %37 : vector<16x16x32xf32> to vector<256x32xf32>
    %c2_53 = arith.constant 2 : index
    %c0_54 = arith.constant 0 : index
    %c0_55 = arith.constant 0 : index
    %39 = vector.load %arg2[%c2_53, %c0_54, %c0_55] : memref<4x32x8xf32, #tpu.memory_space<vmem>>, vector<1x32x8xf32>
    %40 = vector.shape_cast %39 : vector<1x32x8xf32> to vector<32x8xf32>
    %cst_56 = arith.constant dense<0.000000e+00> : vector<256x8xf32>
    %41 = tpu.matmul %38, %40, %cst_56 {dimension_numbers = #tpu.dot_dimension_numbers<[1], [0], [0], [1], [0, 0, 1, 1], [], []>} : vector<256x32xf32>, vector<32x8xf32>, vector<256x8xf32> -> vector<256x8xf32>
    %42 = vector.broadcast %14 : vector<1x8xf32> to vector<256x8xf32>
    %43 = arith.addf %41, %42 : vector<256x8xf32>
    %44 = vector.shape_cast %43 : vector<256x8xf32> to vector<16x16x8xf32>
    %c0_57 = arith.constant 0 : index
    %c0_58 = arith.constant 0 : index
    %c1_59 = arith.constant 1 : index
    %c0_60 = arith.constant 0 : index
    %c0_61 = arith.constant 0 : index
    %45 = vector.load %arg4[%c0_57, %c0_58, %c1_59, %c0_60, %c0_61] : memref<1x16x2x16x16xf32, #tpu.memory_space<vmem>>, vector<1x16x1x16x8xf32>
    %46 = vector.shape_cast %45 : vector<1x16x1x16x8xf32> to vector<16x16x8xf32>
    %47 = vector.shape_cast %44 : vector<16x16x8xf32> to vector<1x16x1x16x8xf32>
    tpu.vector_store %arg4[%c0_57, %c0_58, %c1_59, %c0_60, %c0_61], %47 {strides = array<i32>} : memref<1x16x2x16x16xf32, #tpu.memory_space<vmem>>, vector<1x16x1x16x8xf32>,
    %48 = tpu.concatenate %9, %10, %12, %13 in 2 : vector<16x16x8xf32>, vector<16x16x8xf32>, vector<16x16x8xf32>, vector<16x16x8xf32> -> vector<16x16x32xf32>
    %49 = vector.shape_cast %48 : vector<16x16x32xf32> to vector<256x32xf32>
    %c3 = arith.constant 3 : index
    %c0_62 = arith.constant 0 : index
    %c0_63 = arith.constant 0 : index
    %50 = vector.load %arg2[%c3, %c0_62, %c0_63] : memref<4x32x8xf32, #tpu.memory_space<vmem>>, vector<1x32x8xf32>
    %51 = vector.shape_cast %50 : vector<1x32x8xf32> to vector<32x8xf32>
    %cst_64 = arith.constant dense<0.000000e+00> : vector<256x8xf32>
    %52 = tpu.matmul %49, %51, %cst_64 {dimension_numbers = #tpu.dot_dimension_numbers<[1], [0], [0], [1], [0, 0, 1, 1], [], []>} : vector<256x32xf32>, vector<32x8xf32>, vector<256x8xf32> -> vector<256x8xf32>
    %53 = vector.broadcast %14 : vector<1x8xf32> to vector<256x8xf32>
    %54 = arith.addf %52, %53 : vector<256x8xf32>
    %55 = vector.shape_cast %54 : vector<256x8xf32> to vector<16x16x8xf32>
    %c0_65 = arith.constant 0 : index
    %c0_66 = arith.constant 0 : index
    %c1_67 = arith.constant 1 : index
    %c0_68 = arith.constant 0 : index
    %c8_69 = arith.constant 8 : index
    %56 = vector.load %arg4[%c0_65, %c0_66, %c1_67, %c0_68, %c8_69] : memref<1x16x2x16x16xf32, #tpu.memory_space<vmem>>, vector<1x16x1x16x8xf32>
    %57 = vector.shape_cast %56 : vector<1x16x1x16x8xf32> to vector<16x16x8xf32>
    %58 = vector.shape_cast %55 : vector<16x16x8xf32> to vector<1x16x1x16x8xf32>
    tpu.vector_store %arg4[%c0_65, %c0_66, %c1_67, %c0_68, %c8_69], %58 {strides = array<i32>} : memref<1x16x2x16x16xf32, #tpu.memory_space<vmem>>, vector<1x16x1x16x8xf32>,
    return
  }
  func.func @transform_0(%arg0: i32) -> (i32, i32, i32, i32) {
    %c0_i32 = arith.constant 0 : i32
    %c0_i32_0 = arith.constant 0 : i32
    %c0_i32_1 = arith.constant 0 : i32
    %c0_i32_2 = arith.constant 0 : i32
    return %arg0, %c0_i32, %c0_i32_0, %c0_i32_1 : i32, i32, i32, i32
  }
  func.func @transform_1(%arg0: i32) -> (i32, i32, i32) {
    %c0_i32 = arith.constant 0 : i32
    %c0_i32_0 = arith.constant 0 : i32
    %c0_i32_1 = arith.constant 0 : i32
    %c0_i32_2 = arith.constant 0 : i32
    return %c0_i32, %c0_i32_0, %c0_i32_1 : i32, i32, i32
  }
  func.func @transform_2(%arg0: i32) -> (i32, i32) {
    %c0_i32 = arith.constant 0 : i32
    %c0_i32_0 = arith.constant 0 : i32
    %c0_i32_1 = arith.constant 0 : i32
    return %c0_i32, %c0_i32_0 : i32, i32
  }
  func.func @transform_3(%arg0: i32) -> (i32, i32, i32, i32, i32) {
    %c0_i32 = arith.constant 0 : i32
    %c0_i32_0 = arith.constant 0 : i32
    %c0_i32_1 = arith.constant 0 : i32
    %c0_i32_2 = arith.constant 0 : i32
    %c0_i32_3 = arith.constant 0 : i32
    return %arg0, %c0_i32, %c0_i32_0, %c0_i32_1, %c0_i32_2 : i32, i32, i32, i32, i32
  }
}

</mosaic_0001>

<llo_original>
// kernel: tpu_custom_call.1
$region0: #{tpu_custom_call.1}
  #allocation0 [shape = 'u32[]', space=smem, size = 0x4, offset = 0x4, fixed_abs, tag = 'smem constant byte address 0x4 - core index']
  #allocation1 [shape = 'u32[72,128]{1,0:T(1,128)}', space=vmem, size = 0x9000, scoped, tag = 'internal scratch']
  #allocation2 [shape = 'f32[18,18,8]{2,1,0:T(8,128)}', space=vmem, size = 0x36000, scoped, tag = 'scratch operand']
  %s0 = inlined_call_operand.vmem [shape: f32[2,16,16,8], index: 0, kind: input, shape index: {}]
  %s1 = inlined_call_operand.vmem [shape: f32[4,32,8], index: 1, kind: input, shape index: {}]
  %s2 = inlined_call_operand.vmem [shape: f32[1,8], index: 2, kind: input, shape index: {}]
  %s3 = inlined_call_operand.hbm [shape: f32[2,16,2,16,16], index: 3, kind: output, shape index: {}]
  %s4 = sld [smem:[#allocation0]]
  $region45: #{tpu_custom_call.1} parent=0
    _
  %s6 = ssub.s32 1, %s4
  %s7 = scalar_select 0, %s6, %s4
  $region1: #{tpu_custom_call.1} parent=0
    #allocation3 [shape = 'u8[524288]{0}', space=vmem, size = 0x80000, scoped, tag = 'output window, operand 0']
    #allocation4 [shape = 's32[2]{0}', space=sflag, size = 0x8, scoped, tag = 'scoped memory for tpu_custom_call.1']
    %8 = vsyncpa [#allocation4], 0
    %s9 = scalar_lea.sflag [#allocation4], 1
    %10 = vsyncpa %s9, 0
    loop: start=0, step=1, limit=4
    $region2: #{tpu_custom_call.1} parent=1 // loop_pre_header
      _
    $region3: #{tpu_custom_call.1} parent=1 // loop_header
      %s12 = sphi 0, %s16
      %p13 = scmp.ge.s32.totalorder %s12, 4
      %s22 = sphi 0, %s24
      %s25 = sphi 0, %s22
      %s26 = sphi 0, %s25
      %s42 = sphi 0, %s26
      %s46 = sphi 0, %s46
      %s48 = sphi 0, %s46
      %s49 = sphi 0, %s48
      %s63 = sphi 0, %s49
      %s67 = sphi 0, %s67
      %s69 = sphi 0, %s67
      %s70 = sphi 0, %s69
      %s84 = sphi 0, %s70
      %s90 = sphi 0, %s92
      %s93 = sphi 0, %s90
      %s94 = sphi 0, %s93
      %s110 = sphi 0, %s94
    $region4: #{tpu_custom_call.1} parent=1 // loop_header_branch
      %15 = sbr.rel (%p13) target = $region8
    $region5: #{tpu_custom_call.1} parent=1 // loop_body
      %s17 = ssub.s32 %s12, 1
      %s18 = ssub.s32 %s12, 2
      %s19 = sadd.s32 %s12, 1
      %s20 = ssub.s32 %s12, %s19
      %p21 = scmp.eq.s32.totalorder %s20, 0
      %s23 = sadd.s32 %s22, 1
      %s24 = scalar_select %p21, %s22, %s23
      %p27 = pneg %p21
      %p28 = scmp.eq.s32.totalorder %s12, 1
      %p29 = por %p27, %p28
      %p30 = scmp.ne.s32.totalorder %s22, %s25
      %p31 = scmp.eq.s32.totalorder %s12, 0
      %p32 = por %p30, %p31
      %p33 = scmp.ne.s32.totalorder %s22, %s25
      %p34 = scmp.eq.s32.totalorder %s17, 1
      %p35 = por %p33, %p34
      %p36 = scmp.ne.s32.totalorder %s25, %s26
      %p37 = scmp.eq.s32.totalorder %s17, 0
      %p38 = por %p36, %p37
      %p39 = scmp.ne.s32.totalorder %s25, %s26
      %p40 = scmp.eq.s32.totalorder %s18, 1
      %p41 = por %p39, %p40
      %p43 = scmp.ne.s32.totalorder %s26, %s42
      %p44 = scmp.eq.s32.totalorder %s18, 0
      %p45 = por %p43, %p44
      %s47 = sadd.s32 %s46, 1
      %p50 = scmp.eq.s32.totalorder %s12, 1
      %p51 = scmp.ne.s32.totalorder %s46, %s48
      %p52 = scmp.eq.s32.totalorder %s12, 0
      %p53 = por %p51, %p52
      %p54 = scmp.ne.s32.totalorder %s46, %s48
      %p55 = scmp.eq.s32.totalorder %s17, 1
      %p56 = por %p54, %p55
      %p57 = scmp.ne.s32.totalorder %s48, %s49
      %p58 = scmp.eq.s32.totalorder %s17, 0
      %p59 = por %p57, %p58
      %p60 = scmp.ne.s32.totalorder %s48, %s49
      %p61 = scmp.eq.s32.totalorder %s18, 1
      %p62 = por %p60, %p61
      %p64 = scmp.ne.s32.totalorder %s49, %s63
      %p65 = scmp.eq.s32.totalorder %s18, 0
      %p66 = por %p64, %p65
      %s68 = sadd.s32 %s67, 1
      %p71 = scmp.eq.s32.totalorder %s12, 1
      %p72 = scmp.ne.s32.totalorder %s67, %s69
      %p73 = scmp.eq.s32.totalorder %s12, 0
      %p74 = por %p72, %p73
      %p75 = scmp.ne.s32.totalorder %s67, %s69
      %p76 = scmp.eq.s32.totalorder %s17, 1
      %p77 = por %p75, %p76
      %p78 = scmp.ne.s32.totalorder %s69, %s70
      %p79 = scmp.eq.s32.totalorder %s17, 0
      %p80 = por %p78, %p79
      %p81 = scmp.ne.s32.totalorder %s69, %s70
      %p82 = scmp.eq.s32.totalorder %s18, 1
      %p83 = por %p81, %p82
      %p85 = scmp.ne.s32.totalorder %s70, %s84
      %p86 = scmp.eq.s32.totalorder %s18, 0
      %p87 = por %p85, %p86
      %s88 = ssub.s32 %s12, %s19
      %p89 = scmp.eq.s32.totalorder %s88, 0
      %s91 = sadd.s32 %s90, 1
      %s92 = scalar_select %p89, %s90, %s91
      %p95 = pneg %p89
      %p96 = scmp.eq.s32.totalorder %s12, 1
      %p97 = por %p95, %p96
      %p98 = scmp.ne.s32.totalorder %s90, %s93
      %p99 = scmp.eq.s32.totalorder %s12, 0
      %p100 = por %p98, %p99
      %p101 = scmp.ne.s32.totalorder %s90, %s93
      %p102 = scmp.eq.s32.totalorder %s17, 1
      %p103 = por %p101, %p102
      %p104 = scmp.ne.s32.totalorder %s93, %s94
      %p105 = scmp.eq.s32.totalorder %s17, 0
      %p106 = por %p104, %p105
      %p107 = scmp.ne.s32.totalorder %s93, %s94
      %p108 = scmp.eq.s32.totalorder %s18, 1
      %p109 = por %p107, %p108
      %p111 = scmp.ne.s32.totalorder %s94, %s110
      %p112 = scmp.eq.s32.totalorder %s18, 0
      %p113 = por %p111, %p112
      %p114 = scmp.le.s32.totalorder 1, %s12
      %p115 = scmp.lt.s32.totalorder %s12, 3
      %p116 = pnand %p114, %p115
      %p117 = pneg %p116
      // Predicated region
      $region9: #{tpu_custom_call.1} parent=5 // pred_check
        _
      $region10: #{tpu_custom_call.1} parent=5 // pred_check_branch
        %119 = sbr.rel (%p116) target = $region12
      $region11: #{tpu_custom_call.1} parent=5 // pred_region
        %s120 = ssub.s32 %s12, 1
        // Predicated region
        $region13: #{tpu_custom_call.1} parent=11 // pred_check
          %p121 = pneg %p59
        $region14: #{tpu_custom_call.1} parent=11 // pred_check_branch
          %123 = sbr.rel (%p121) target = $region16
        $region15: #{tpu_custom_call.1} parent=11 // pred_region
          _
        $region16: #{tpu_custom_call.1} parent=11 // pred_fallthru
          _
        // Predicated region
        $region17: #{tpu_custom_call.1} parent=11 // pred_check
          %p124 = pneg %p80
        $region18: #{tpu_custom_call.1} parent=11 // pred_check_branch
          %126 = sbr.rel (%p124) target = $region20
        $region19: #{tpu_custom_call.1} parent=11 // pred_region
          _
        $region20: #{tpu_custom_call.1} parent=11 // pred_fallthru
          _
      $region12: #{tpu_custom_call.1} parent=5 // pred_fallthru
        _
      %p127 = scmp.lt.s32.totalorder %s12, 2
      // Predicated region
      $region21: #{tpu_custom_call.1} parent=5 // pred_check
        %p128 = pneg %p127
      $region22: #{tpu_custom_call.1} parent=5 // pred_check_branch
        %130 = sbr.rel (%p128) target = $region24
      $region23: #{tpu_custom_call.1} parent=5 // pred_region
        // Predicated region
        $region25: #{tpu_custom_call.1} parent=23 // pred_check
          %p131 = pneg %p32
        $region26: #{tpu_custom_call.1} parent=23 // pred_check_branch
          %133 = sbr.rel (%p131) target = $region28
        $region27: #{tpu_custom_call.1} parent=23 // pred_region
          %p134 = scmp.lt.s32.totalorder %s12, 1
          %s135 = scalar_select %p134, %s12, 1
          %s136 = smul.addr %s135, 32
          %s137 = smul.addr %s136, 8
          %s138 = scalar_lea.vmem %s0, %s137
        $region28: #{tpu_custom_call.1} parent=23 // pred_fallthru
          _
      $region24: #{tpu_custom_call.1} parent=5 // pred_fallthru
        _
      %p139 = scmp.le.s32.totalorder 1, %s12
      %p140 = scmp.lt.s32.totalorder %s12, 3
      %p141 = pnand %p139, %p140
      %p142 = pneg %p141
      // Predicated region
      $region29: #{tpu_custom_call.1} parent=5 // pred_check
        _
      $region30: #{tpu_custom_call.1} parent=5 // pred_check_branch
        %144 = sbr.rel (%p141) target = $region32
      $region31: #{tpu_custom_call.1} parent=5 // pred_region
        %s145 = ssub.s32 %s12, 1
        %p146 = scmp.lt.s32.totalorder %s17, 1
        %s147 = scalar_select %p146, %s17, 1
        %s148 = smul.addr %s147, 32
        %s149 = smul.addr %s148, 8
        %s150 = scalar_lea.vmem %s0, %s149
        %p151 = pneg %p38
        %p152 = pneg %p35
        %p153 = pneg %p59
        %p154 = pneg %p56
        %p155 = pneg %p80
        %p156 = pneg %p77
        %p157 = pneg %p106
        %p158 = pneg %p103
        %s159 = sand.u32 %s93, 1
        %s160 = scalar_lea.sflag [#allocation4], %s159
        %s161 = sand.u32 %s93, 1
        %s162 = smul.addr %s161, 512
        %s163 = scalar_lea.vmem [#allocation3], %s162
        %p164 = scmp.lt.s32.totalorder %s17, 1
        %s165 = scalar_select %p164, %s17, 1
        %s166 = smul.addr %s165, 32
        %s167 = smul.addr %s166, 8
        %s168 = scalar_lea.vmem %s0, %s167
        %vm169 = vcmask 64512
        %170 = vst.msk [vmem:[#allocation2] sm:$0xff] %vm169, 0.0
        %171 = vst.msk [vmem:[#allocation2 + $0x8] sm:$0xff] %vm169, 0.0
        %vm172 = vcmask 58368
        %173 = vst.msk [vmem:[#allocation2 + $0x10] sm:$0x3] %vm172, 0.0
        %174 = vst.msk [vmem:[#allocation2 + $0x18] sm:$0xff] %vm169, 0.0
        %175 = vst.msk [vmem:[#allocation2 + $0x20] sm:$0xff] %vm169, 0.0
        %176 = vst.msk [vmem:[#allocation2 + $0x28] sm:$0x3] %vm172, 0.0
        %177 = vst.msk [vmem:[#allocation2 + $0x30] sm:$0xff] %vm169, 0.0
        %178 = vst.msk [vmem:[#allocation2 + $0x38] sm:$0xff] %vm169, 0.0
        %179 = vst.msk [vmem:[#allocation2 + $0x40] sm:$0x3] %vm172, 0.0
        %180 = vst.msk [vmem:[#allocation2 + $0x48] sm:$0xff] %vm169, 0.0
        %181 = vst.msk [vmem:[#allocation2 + $0x50] sm:$0xff] %vm169, 0.0
        %182 = vst.msk [vmem:[#allocation2 + $0x58] sm:$0x3] %vm172, 0.0
        %183 = vst.msk [vmem:[#allocation2 + $0x60] sm:$0xff] %vm169, 0.0
        %184 = vst.msk [vmem:[#allocation2 + $0x68] sm:$0xff] %vm169, 0.0
        %185 = vst.msk [vmem:[#allocation2 + $0x70] sm:$0x3] %vm172, 0.0
        %186 = vst.msk [vmem:[#allocation2 + $0x78] sm:$0xff] %vm169, 0.0
        %187 = vst.msk [vmem:[#allocation2 + $0x80] sm:$0xff] %vm169, 0.0
        %188 = vst.msk [vmem:[#allocation2 + $0x88] sm:$0x3] %vm172, 0.0
        %189 = vst.msk [vmem:[#allocation2 + $0x90] sm:$0xff] %vm169, 0.0
        %190 = vst.msk [vmem:[#allocation2 + $0x98] sm:$0xff] %vm169, 0.0
        %191 = vst.msk [vmem:[#allocation2 + $0xa0] sm:$0x3] %vm172, 0.0
        %192 = vst.msk [vmem:[#allocation2 + $0xa8] sm:$0xff] %vm169, 0.0
        %193 = vst.msk [vmem:[#allocation2 + $0xb0] sm:$0xff] %vm169, 0.0
        %194 = vst.msk [vmem:[#allocation2 + $0xb8] sm:$0x3] %vm172, 0.0
        %195 = vst.msk [vmem:[#allocation2 + $0xc0] sm:$0xff] %vm169, 0.0
        %196 = vst.msk [vmem:[#allocation2 + $0xc8] sm:$0xff] %vm169, 0.0
        %197 = vst.msk [vmem:[#allocation2 + $0xd0] sm:$0x3] %vm172, 0.0
        %198 = vst.msk [vmem:[#allocation2 + $0xd8] sm:$0xff] %vm169, 0.0
        %199 = vst.msk [vmem:[#allocation2 + $0xe0] sm:$0xff] %vm169, 0.0
        %200 = vst.msk [vmem:[#allocation2 + $0xe8] sm:$0x3] %vm172, 0.0
        %201 = vst.msk [vmem:[#allocation2 + $0xf0] sm:$0xff] %vm169, 0.0
        %202 = vst.msk [vmem:[#allocation2 + $0xf8] sm:$0xff] %vm169, 0.0
        %203 = vst.msk [vmem:[#allocation2 + $0x100] sm:$0x3] %vm172, 0.0
        %204 = vst.msk [vmem:[#allocation2 + $0x108] sm:$0xff] %vm169, 0.0
        %205 = vst.msk [vmem:[#allocation2 + $0x110] sm:$0xff] %vm169, 0.0
        %206 = vst.msk [vmem:[#allocation2 + $0x118] sm:$0x3] %vm172, 0.0
        %207 = vst.msk [vmem:[#allocation2 + $0x120] sm:$0xff] %vm169, 0.0
        %208 = vst.msk [vmem:[#allocation2 + $0x128] sm:$0xff] %vm169, 0.0
        %209 = vst.msk [vmem:[#allocation2 + $0x130] sm:$0x3] %vm172, 0.0
        %210 = vst.msk [vmem:[#allocation2 + $0x138] sm:$0xff] %vm169, 0.0
        %211 = vst.msk [vmem:[#allocation2 + $0x140] sm:$0xff] %vm169, 0.0
        %212 = vst.msk [vmem:[#allocation2 + $0x148] sm:$0x3] %vm172, 0.0
        %213 = vst.msk [vmem:[#allocation2 + $0x150] sm:$0xff] %vm169, 0.0
        %214 = vst.msk [vmem:[#allocation2 + $0x158] sm:$0xff] %vm169, 0.0
        %215 = vst.msk [vmem:[#allocation2 + $0x160] sm:$0x3] %vm172, 0.0
        %216 = vst.msk [vmem:[#allocation2 + $0x168] sm:$0xff] %vm169, 0.0
        %217 = vst.msk [vmem:[#allocation2 + $0x170] sm:$0xff] %vm169, 0.0
        %218 = vst.msk [vmem:[#allocation2 + $0x178] sm:$0x3] %vm172, 0.0
        %219 = vst.msk [vmem:[#allocation2 + $0x180] sm:$0xff] %vm169, 0.0
        %220 = vst.msk [vmem:[#allocation2 + $0x188] sm:$0xff] %vm169, 0.0
        %221 = vst.msk [vmem:[#allocation2 + $0x190] sm:$0x3] %vm172, 0.0
        %222 = vst.msk [vmem:[#allocation2 + $0x198] sm:$0xff] %vm169, 0.0
        %223 = vst.msk [vmem:[#allocation2 + $0x1a0] sm:$0xff] %vm169, 0.0
        %224 = vst.msk [vmem:[#allocation2 + $0x1a8] sm:$0x3] %vm172, 0.0
        %v225 = vld [vmem:[%s168] sm:$0xff]
        %v226 = vld [vmem:[%s168 + $0x8] sm:$0xff]
        %v227 = vld [vmem:[%s168 + $0x10] sm:$0xff]
        %v228 = vld [vmem:[%s168 + $0x18] sm:$0xff]
        %v229 = vld [vmem:[%s168 + $0x20] sm:$0xff]
        %v230 = vld [vmem:[%s168 + $0x28] sm:$0xff]
        %v231 = vld [vmem:[%s168 + $0x30] sm:$0xff]
        %v232 = vld [vmem:[%s168 + $0x38] sm:$0xff]
        %v233 = vld [vmem:[%s168 + $0x40] sm:$0xff]
        %v234 = vld [vmem:[%s168 + $0x48] sm:$0xff]
        %v235 = vld [vmem:[%s168 + $0x50] sm:$0xff]
        %v236 = vld [vmem:[%s168 + $0x58] sm:$0xff]
        %v237 = vld [vmem:[%s168 + $0x60] sm:$0xff]
        %v238 = vld [vmem:[%s168 + $0x68] sm:$0xff]
        %v239 = vld [vmem:[%s168 + $0x70] sm:$0xff]
        %v240 = vld [vmem:[%s168 + $0x78] sm:$0xff]
        %v241 = vld [vmem:[%s168 + $0x80] sm:$0xff]
        %v242 = vld [vmem:[%s168 + $0x88] sm:$0xff]
        %v243 = vld [vmem:[%s168 + $0x90] sm:$0xff]
        %v244 = vld [vmem:[%s168 + $0x98] sm:$0xff]
        %v245 = vld [vmem:[%s168 + $0xa0] sm:$0xff]
        %v246 = vld [vmem:[%s168 + $0xa8] sm:$0xff]
        %v247 = vld [vmem:[%s168 + $0xb0] sm:$0xff]
        %v248 = vld [vmem:[%s168 + $0xb8] sm:$0xff]
        %v249 = vld [vmem:[%s168 + $0xc0] sm:$0xff]
        %v250 = vld [vmem:[%s168 + $0xc8] sm:$0xff]
        %v251 = vld [vmem:[%s168 + $0xd0] sm:$0xff]
        %v252 = vld [vmem:[%s168 + $0xd8] sm:$0xff]
        %v253 = vld [vmem:[%s168 + $0xe0] sm:$0xff]
        %v254 = vld [vmem:[%s168 + $0xe8] sm:$0xff]
        %v255 = vld [vmem:[%s168 + $0xf0] sm:$0xff]
        %v256 = vld [vmem:[%s168 + $0xf8] sm:$0xff]
        %s257 = scalar_lea.vmem [#allocation2], 24
        %258 = vst.msk [vmem:[%s257 + $0x1] sm:$0xff] %vm169, %v225
        %259 = vst.msk [vmem:[%s257 + $0x9] sm:$0xff] %vm169, %v226
        %260 = vst.msk [vmem:[%s257 + $0x19] sm:$0xff] %vm169, %v227
        %261 = vst.msk [vmem:[%s257 + $0x21] sm:$0xff] %vm169, %v228
        %262 = vst.msk [vmem:[%s257 + $0x31] sm:$0xff] %vm169, %v229
        %263 = vst.msk [vmem:[%s257 + $0x39] sm:$0xff] %vm169, %v230
        %264 = vst.msk [vmem:[%s257 + $0x49] sm:$0xff] %vm169, %v231
        %265 = vst.msk [vmem:[%s257 + $0x51] sm:$0xff] %vm169, %v232
        %266 = vst.msk [vmem:[%s257 + $0x61] sm:$0xff] %vm169, %v233
        %267 = vst.msk [vmem:[%s257 + $0x69] sm:$0xff] %vm169, %v234
        %268 = vst.msk [vmem:[%s257 + $0x79] sm:$0xff] %vm169, %v235
        %269 = vst.msk [vmem:[%s257 + $0x81] sm:$0xff] %vm169, %v236
        %270 = vst.msk [vmem:[%s257 + $0x91] sm:$0xff] %vm169, %v237
        %271 = vst.msk [vmem:[%s257 + $0x99] sm:$0xff] %vm169, %v238
        %272 = vst.msk [vmem:[%s257 + $0xa9] sm:$0xff] %vm169, %v239
        %273 = vst.msk [vmem:[%s257 + $0xb1] sm:$0xff] %vm169, %v240
        %274 = vst.msk [vmem:[%s257 + $0xc1] sm:$0xff] %vm169, %v241
        %275 = vst.msk [vmem:[%s257 + $0xc9] sm:$0xff] %vm169, %v242
        %276 = vst.msk [vmem:[%s257 + $0xd9] sm:$0xff] %vm169, %v243
        %277 = vst.msk [vmem:[%s257 + $0xe1] sm:$0xff] %vm169, %v244
        %278 = vst.msk [vmem:[%s257 + $0xf1] sm:$0xff] %vm169, %v245
        %279 = vst.msk [vmem:[%s257 + $0xf9] sm:$0xff] %vm169, %v246
        %280 = vst.msk [vmem:[%s257 + $0x109] sm:$0xff] %vm169, %v247
        %281 = vst.msk [vmem:[%s257 + $0x111] sm:$0xff] %vm169, %v248
        %282 = vst.msk [vmem:[%s257 + $0x121] sm:$0xff] %vm169, %v249
        %283 = vst.msk [vmem:[%s257 + $0x129] sm:$0xff] %vm169, %v250
        %284 = vst.msk [vmem:[%s257 + $0x139] sm:$0xff] %vm169, %v251
        %285 = vst.msk [vmem:[%s257 + $0x141] sm:$0xff] %vm169, %v252
        %286 = vst.msk [vmem:[%s257 + $0x151] sm:$0xff] %vm169, %v253
        %287 = vst.msk [vmem:[%s257 + $0x159] sm:$0xff] %vm169, %v254
        %288 = vst.msk [vmem:[%s257 + $0x169] sm:$0xff] %vm169, %v255
        %289 = vst.msk [vmem:[%s257 + $0x171] sm:$0xff] %vm169, %v256
        %v290 = vld [vmem:[#allocation2] sm:$0xff]
        %v291 = vld [vmem:[#allocation2 + $0x8] sm:$0xff]
        %v292 = vld [vmem:[#allocation2 + $0x18] sm:$0xff]
        %v293 = vld [vmem:[#allocation2 + $0x20] sm:$0xff]
        %v294 = vld [vmem:[#allocation2 + $0x30] sm:$0xff]
        %v295 = vld [vmem:[#allocation2 + $0x38] sm:$0xff]
        %v296 = vld [vmem:[#allocation2 + $0x48] sm:$0xff]
        %v297 = vld [vmem:[#allocation2 + $0x50] sm:$0xff]
        %v298 = vld [vmem:[#allocation2 + $0x60] sm:$0xff]
        %v299 = vld [vmem:[#allocation2 + $0x68] sm:$0xff]
        %v300 = vld [vmem:[#allocation2 + $0x78] sm:$0xff]
        %v301 = vld [vmem:[#allocation2 + $0x80] sm:$0xff]
        %v302 = vld [vmem:[#allocation2 + $0x90] sm:$0xff]
        %v303 = vld [vmem:[#allocation2 + $0x98] sm:$0xff]
        %v304 = vld [vmem:[#allocation2 + $0xa8] sm:$0xff]
        %v305 = vld [vmem:[#allocation2 + $0xb0] sm:$0xff]
        %v306 = vld [vmem:[#allocation2 + $0xc0] sm:$0xff]
        %v307 = vld [vmem:[#allocation2 + $0xc8] sm:$0xff]
        %v308 = vld [vmem:[#allocation2 + $0xd8] sm:$0xff]
        %v309 = vld [vmem:[#allocation2 + $0xe0] sm:$0xff]
        %v310 = vld [vmem:[#allocation2 + $0xf0] sm:$0xff]
        %v311 = vld [vmem:[#allocation2 + $0xf8] sm:$0xff]
        %v312 = vld [vmem:[#allocation2 + $0x108] sm:$0xff]
        %v313 = vld [vmem:[#allocation2 + $0x110] sm:$0xff]
        %v314 = vld [vmem:[#allocation2 + $0x120] sm:$0xff]
        %v315 = vld [vmem:[#allocation2 + $0x128] sm:$0xff]
        %v316 = vld [vmem:[#allocation2 + $0x138] sm:$0xff]
        %v317 = vld [vmem:[#allocation2 + $0x140] sm:$0xff]
        %v318 = vld [vmem:[#allocation2 + $0x150] sm:$0xff]
        %v319 = vld [vmem:[#allocation2 + $0x158] sm:$0xff]
        %v320 = vld [vmem:[#allocation2 + $0x168] sm:$0xff]
        %v321 = vld [vmem:[#allocation2 + $0x170] sm:$0xff]
        %v322 = vld [vmem:[#allocation2 + $0x1] sm:$0xff]
        %v323 = vld [vmem:[#allocation2 + $0x9] sm:$0xff]
        %v324 = vld [vmem:[#allocation2 + $0x19] sm:$0xff]
        %v325 = vld [vmem:[#allocation2 + $0x21] sm:$0xff]
        %v326 = vld [vmem:[#allocation2 + $0x31] sm:$0xff]
        %v327 = vld [vmem:[#allocation2 + $0x39] sm:$0xff]
        %v328 = vld [vmem:[#allocation2 + $0x49] sm:$0xff]
        %v329 = vld [vmem:[#allocation2 + $0x51] sm:$0xff]
        %v330 = vld [vmem:[#allocation2 + $0x61] sm:$0xff]
        %v331 = vld [vmem:[#allocation2 + $0x69] sm:$0xff]
        %v332 = vld [vmem:[#allocation2 + $0x79] sm:$0xff]
        %v333 = vld [vmem:[#allocation2 + $0x81] sm:$0xff]
        %v334 = vld [vmem:[#allocation2 + $0x91] sm:$0xff]
        %v335 = vld [vmem:[#allocation2 + $0x99] sm:$0xff]
        %v336 = vld [vmem:[#allocation2 + $0xa9] sm:$0xff]
        %v337 = vld [vmem:[#allocation2 + $0xb1] sm:$0xff]
        %v338 = vld [vmem:[#allocation2 + $0xc1] sm:$0xff]
        %v339 = vld [vmem:[#allocation2 + $0xc9] sm:$0xff]
        %v340 = vld [vmem:[#allocation2 + $0xd9] sm:$0xff]
        %v341 = vld [vmem:[#allocation2 + $0xe1] sm:$0xff]
        %v342 = vld [vmem:[#allocation2 + $0xf1] sm:$0xff]
        %v343 = vld [vmem:[#allocation2 + $0xf9] sm:$0xff]
        %v344 = vld [vmem:[#allocation2 + $0x109] sm:$0xff]
        %v345 = vld [vmem:[#allocation2 + $0x111] sm:$0xff]
        %v346 = vld [vmem:[#allocation2 + $0x121] sm:$0xff]
        %v347 = vld [vmem:[#allocation2 + $0x129] sm:$0xff]
        %v348 = vld [vmem:[#allocation2 + $0x139] sm:$0xff]
        %v349 = vld [vmem:[#allocation2 + $0x141] sm:$0xff]
        %v350 = vld [vmem:[#allocation2 + $0x151] sm:$0xff]
        %v351 = vld [vmem:[#allocation2 + $0x159] sm:$0xff]
        %v352 = vld [vmem:[#allocation2 + $0x169] sm:$0xff]
        %v353 = vld [vmem:[#allocation2 + $0x171] sm:$0xff]
        %v354 = vld [vmem:[#allocation2 + $0x2] sm:$0xff]
        %v355 = vld [vmem:[#allocation2 + $0xa] sm:$0xff]
        %v356 = vld [vmem:[#allocation2 + $0x1a] sm:$0xff]
        %v357 = vld [vmem:[#allocation2 + $0x22] sm:$0xff]
        %v358 = vld [vmem:[#allocation2 + $0x32] sm:$0xff]
        %v359 = vld [vmem:[#allocation2 + $0x3a] sm:$0xff]
        %v360 = vld [vmem:[#allocation2 + $0x4a] sm:$0xff]
        %v361 = vld [vmem:[#allocation2 + $0x52] sm:$0xff]
        %v362 = vld [vmem:[#allocation2 + $0x62] sm:$0xff]
        %v363 = vld [vmem:[#allocation2 + $0x6a] sm:$0xff]
        %v364 = vld [vmem:[#allocation2 + $0x7a] sm:$0xff]
        %v365 = vld [vmem:[#allocation2 + $0x82] sm:$0xff]
        %v366 = vld [vmem:[#allocation2 + $0x92] sm:$0xff]
        %v367 = vld [vmem:[#allocation2 + $0x9a] sm:$0xff]
        %v368 = vld [vmem:[#allocation2 + $0xaa] sm:$0xff]
        %v369 = vld [vmem:[#allocation2 + $0xb2] sm:$0xff]
        %v370 = vld [vmem:[#allocation2 + $0xc2] sm:$0xff]
        %v371 = vld [vmem:[#allocation2 + $0xca] sm:$0xff]
        %v372 = vld [vmem:[#allocation2 + $0xda] sm:$0xff]
        %v373 = vld [vmem:[#allocation2 + $0xe2] sm:$0xff]
        %v374 = vld [vmem:[#allocation2 + $0xf2] sm:$0xff]
        %v375 = vld [vmem:[#allocation2 + $0xfa] sm:$0xff]
        %v376 = vld [vmem:[#allocation2 + $0x10a] sm:$0xff]
        %v377 = vld [vmem:[#allocation2 + $0x112] sm:$0xff]
        %v378 = vld [vmem:[#allocation2 + $0x122] sm:$0xff]
        %v379 = vld [vmem:[#allocation2 + $0x12a] sm:$0xff]
        %v380 = vld [vmem:[#allocation2 + $0x13a] sm:$0xff]
        %v381 = vld [vmem:[#allocation2 + $0x142] sm:$0xff]
        %v382 = vld [vmem:[#allocation2 + $0x152] sm:$0xff]
        %v383 = vld [vmem:[#allocation2 + $0x15a] sm:$0xff]
        %v384 = vld [vmem:[#allocation2 + $0x16a] sm:$0xff]
        %v385 = vld [vmem:[#allocation2 + $0x172] sm:$0xff]
        %v386 = vld [vmem:[%s257] sm:$0xff]
        %v387 = vld [vmem:[%s257 + $0x8] sm:$0xff]
        %v388 = vld [vmem:[%s257 + $0x18] sm:$0xff]
        %v389 = vld [vmem:[%s257 + $0x20] sm:$0xff]
        %v390 = vld [vmem:[%s257 + $0x30] sm:$0xff]
        %v391 = vld [vmem:[%s257 + $0x38] sm:$0xff]
        %v392 = vld [vmem:[%s257 + $0x48] sm:$0xff]
        %v393 = vld [vmem:[%s257 + $0x50] sm:$0xff]
        %v394 = vld [vmem:[%s257 + $0x60] sm:$0xff]
        %v395 = vld [vmem:[%s257 + $0x68] sm:$0xff]
        %v396 = vld [vmem:[%s257 + $0x78] sm:$0xff]
        %v397 = vld [vmem:[%s257 + $0x80] sm:$0xff]
        %v398 = vld [vmem:[%s257 + $0x90] sm:$0xff]
        %v399 = vld [vmem:[%s257 + $0x98] sm:$0xff]
        %v400 = vld [vmem:[%s257 + $0xa8] sm:$0xff]
        %v401 = vld [vmem:[%s257 + $0xb0] sm:$0xff]
        %v402 = vld [vmem:[%s257 + $0xc0] sm:$0xff]
        %v403 = vld [vmem:[%s257 + $0xc8] sm:$0xff]
        %v404 = vld [vmem:[%s257 + $0xd8] sm:$0xff]
        %v405 = vld [vmem:[%s257 + $0xe0] sm:$0xff]
        %v406 = vld [vmem:[%s257 + $0xf0] sm:$0xff]
        %v407 = vld [vmem:[%s257 + $0xf8] sm:$0xff]
        %v408 = vld [vmem:[%s257 + $0x108] sm:$0xff]
        %v409 = vld [vmem:[%s257 + $0x110] sm:$0xff]
        %v410 = vld [vmem:[%s257 + $0x120] sm:$0xff]
        %v411 = vld [vmem:[%s257 + $0x128] sm:$0xff]
        %v412 = vld [vmem:[%s257 + $0x138] sm:$0xff]
        %v413 = vld [vmem:[%s257 + $0x140] sm:$0xff]
        %v414 = vld [vmem:[%s257 + $0x150] sm:$0xff]
        %v415 = vld [vmem:[%s257 + $0x158] sm:$0xff]
        %v416 = vld [vmem:[%s257 + $0x168] sm:$0xff]
        %v417 = vld [vmem:[%s257 + $0x170] sm:$0xff]
        %v418 = vld [vmem:[%s257 + $0x1] sm:$0xff]
        %v419 = vld [vmem:[%s257 + $0x9] sm:$0xff]
        %v420 = vld [vmem:[%s257 + $0x19] sm:$0xff]
        %v421 = vld [vmem:[%s257 + $0x21] sm:$0xff]
        %v422 = vld [vmem:[%s257 + $0x31] sm:$0xff]
        %v423 = vld [vmem:[%s257 + $0x39] sm:$0xff]
        %v424 = vld [vmem:[%s257 + $0x49] sm:$0xff]
        %v425 = vld [vmem:[%s257 + $0x51] sm:$0xff]
        %v426 = vld [vmem:[%s257 + $0x61] sm:$0xff]
        %v427 = vld [vmem:[%s257 + $0x69] sm:$0xff]
        %v428 = vld [vmem:[%s257 + $0x79] sm:$0xff]
        %v429 = vld [vmem:[%s257 + $0x81] sm:$0xff]
        %v430 = vld [vmem:[%s257 + $0x91] sm:$0xff]
        %v431 = vld [vmem:[%s257 + $0x99] sm:$0xff]
        %v432 = vld [vmem:[%s257 + $0xa9] sm:$0xff]
        %v433 = vld [vmem:[%s257 + $0xb1] sm:$0xff]
        %v434 = vld [vmem:[%s257 + $0xc1] sm:$0xff]
        %v435 = vld [vmem:[%s257 + $0xc9] sm:$0xff]
        %v436 = vld [vmem:[%s257 + $0xd9] sm:$0xff]
        %v437 = vld [vmem:[%s257 + $0xe1] sm:$0xff]
        %v438 = vld [vmem:[%s257 + $0xf1] sm:$0xff]
        %v439 = vld [vmem:[%s257 + $0xf9] sm:$0xff]
        %v440 = vld [vmem:[%s257 + $0x109] sm:$0xff]
        %v441 = vld [vmem:[%s257 + $0x111] sm:$0xff]
        %v442 = vld [vmem:[%s257 + $0x121] sm:$0xff]
        %v443 = vld [vmem:[%s257 + $0x129] sm:$0xff]
        %v444 = vld [vmem:[%s257 + $0x139] sm:$0xff]
        %v445 = vld [vmem:[%s257 + $0x141] sm:$0xff]
        %v446 = vld [vmem:[%s257 + $0x151] sm:$0xff]
        %v447 = vld [vmem:[%s257 + $0x159] sm:$0xff]
        %v448 = vld [vmem:[%s257 + $0x169] sm:$0xff]
        %v449 = vld [vmem:[%s257 + $0x171] sm:$0xff]
        %v450 = vld [vmem:[%s257 + $0x2] sm:$0xff]
        %v451 = vld [vmem:[%s257 + $0xa] sm:$0xff]
        %v452 = vld [vmem:[%s257 + $0x1a] sm:$0xff]
        %v453 = vld [vmem:[%s257 + $0x22] sm:$0xff]
        %v454 = vld [vmem:[%s257 + $0x32] sm:$0xff]
        %v455 = vld [vmem:[%s257 + $0x3a] sm:$0xff]
        %v456 = vld [vmem:[%s257 + $0x4a] sm:$0xff]
        %v457 = vld [vmem:[%s257 + $0x52] sm:$0xff]
        %v458 = vld [vmem:[%s257 + $0x62] sm:$0xff]
        %v459 = vld [vmem:[%s257 + $0x6a] sm:$0xff]
        %v460 = vld [vmem:[%s257 + $0x7a] sm:$0xff]
        %v461 = vld [vmem:[%s257 + $0x82] sm:$0xff]
        %v462 = vld [vmem:[%s257 + $0x92] sm:$0xff]
        %v463 = vld [vmem:[%s257 + $0x9a] sm:$0xff]
        %v464 = vld [vmem:[%s257 + $0xaa] sm:$0xff]
        %v465 = vld [vmem:[%s257 + $0xb2] sm:$0xff]
        %v466 = vld [vmem:[%s257 + $0xc2] sm:$0xff]
        %v467 = vld [vmem:[%s257 + $0xca] sm:$0xff]
        %v468 = vld [vmem:[%s257 + $0xda] sm:$0xff]
        %v469 = vld [vmem:[%s257 + $0xe2] sm:$0xff]
        %v470 = vld [vmem:[%s257 + $0xf2] sm:$0xff]
        %v471 = vld [vmem:[%s257 + $0xfa] sm:$0xff]
        %v472 = vld [vmem:[%s257 + $0x10a] sm:$0xff]
        %v473 = vld [vmem:[%s257 + $0x112] sm:$0xff]
        %v474 = vld [vmem:[%s257 + $0x122] sm:$0xff]
        %v475 = vld [vmem:[%s257 + $0x12a] sm:$0xff]
        %v476 = vld [vmem:[%s257 + $0x13a] sm:$0xff]
        %v477 = vld [vmem:[%s257 + $0x142] sm:$0xff]
        %v478 = vld [vmem:[%s257 + $0x152] sm:$0xff]
        %v479 = vld [vmem:[%s257 + $0x15a] sm:$0xff]
        %v480 = vld [vmem:[%s257 + $0x16a] sm:$0xff]
        %v481 = vld [vmem:[%s257 + $0x172] sm:$0xff]
        %s482 = scalar_lea.vmem [#allocation2], 48
        %v483 = vld [vmem:[%s482] sm:$0xff]
        %v484 = vld [vmem:[%s482 + $0x8] sm:$0xff]
        %v485 = vld [vmem:[%s482 + $0x18] sm:$0xff]
        %v486 = vld [vmem:[%s482 + $0x20] sm:$0xff]
        %v487 = vld [vmem:[%s482 + $0x30] sm:$0xff]
        %v488 = vld [vmem:[%s482 + $0x38] sm:$0xff]
        %v489 = vld [vmem:[%s482 + $0x48] sm:$0xff]
        %v490 = vld [vmem:[%s482 + $0x50] sm:$0xff]
        %v491 = vld [vmem:[%s482 + $0x60] sm:$0xff]
        %v492 = vld [vmem:[%s482 + $0x68] sm:$0xff]
        %v493 = vld [vmem:[%s482 + $0x78] sm:$0xff]
        %v494 = vld [vmem:[%s482 + $0x80] sm:$0xff]
        %v495 = vld [vmem:[%s482 + $0x90] sm:$0xff]
        %v496 = vld [vmem:[%s482 + $0x98] sm:$0xff]
        %v497 = vld [vmem:[%s482 + $0xa8] sm:$0xff]
        %v498 = vld [vmem:[%s482 + $0xb0] sm:$0xff]
        %v499 = vld [vmem:[%s482 + $0xc0] sm:$0xff]
        %v500 = vld [vmem:[%s482 + $0xc8] sm:$0xff]
        %v501 = vld [vmem:[%s482 + $0xd8] sm:$0xff]
        %v502 = vld [vmem:[%s482 + $0xe0] sm:$0xff]
        %v503 = vld [vmem:[%s482 + $0xf0] sm:$0xff]
        %v504 = vld [vmem:[%s482 + $0xf8] sm:$0xff]
        %v505 = vld [vmem:[%s482 + $0x108] sm:$0xff]
        %v506 = vld [vmem:[%s482 + $0x110] sm:$0xff]
        %v507 = vld [vmem:[%s482 + $0x120] sm:$0xff]
        %v508 = vld [vmem:[%s482 + $0x128] sm:$0xff]
        %v509 = vld [vmem:[%s482 + $0x138] sm:$0xff]
        %v510 = vld [vmem:[%s482 + $0x140] sm:$0xff]
        %v511 = vld [vmem:[%s482 + $0x150] sm:$0xff]
        %v512 = vld [vmem:[%s482 + $0x158] sm:$0xff]
        %v513 = vld [vmem:[%s482 + $0x168] sm:$0xff]
        %v514 = vld [vmem:[%s482 + $0x170] sm:$0xff]
        %v515 = vld [vmem:[%s482 + $0x1] sm:$0xff]
        %v516 = vld [vmem:[%s482 + $0x9] sm:$0xff]
        %v517 = vld [vmem:[%s482 + $0x19] sm:$0xff]
        %v518 = vld [vmem:[%s482 + $0x21] sm:$0xff]
        %v519 = vld [vmem:[%s482 + $0x31] sm:$0xff]
        %v520 = vld [vmem:[%s482 + $0x39] sm:$0xff]
        %v521 = vld [vmem:[%s482 + $0x49] sm:$0xff]
        %v522 = vld [vmem:[%s482 + $0x51] sm:$0xff]
        %v523 = vld [vmem:[%s482 + $0x61] sm:$0xff]
        %v524 = vld [vmem:[%s482 + $0x69] sm:$0xff]
        %v525 = vld [vmem:[%s482 + $0x79] sm:$0xff]
        %v526 = vld [vmem:[%s482 + $0x81] sm:$0xff]
        %v527 = vld [vmem:[%s482 + $0x91] sm:$0xff]
        %v528 = vld [vmem:[%s482 + $0x99] sm:$0xff]
        %v529 = vld [vmem:[%s482 + $0xa9] sm:$0xff]
        %v530 = vld [vmem:[%s482 + $0xb1] sm:$0xff]
        %v531 = vld [vmem:[%s482 + $0xc1] sm:$0xff]
        %v532 = vld [vmem:[%s482 + $0xc9] sm:$0xff]
        %v533 = vld [vmem:[%s482 + $0xd9] sm:$0xff]
        %v534 = vld [vmem:[%s482 + $0xe1] sm:$0xff]
        %v535 = vld [vmem:[%s482 + $0xf1] sm:$0xff]
        %v536 = vld [vmem:[%s482 + $0xf9] sm:$0xff]
        %v537 = vld [vmem:[%s482 + $0x109] sm:$0xff]
        %v538 = vld [vmem:[%s482 + $0x111] sm:$0xff]
        %v539 = vld [vmem:[%s482 + $0x121] sm:$0xff]
        %v540 = vld [vmem:[%s482 + $0x129] sm:$0xff]
        %v541 = vld [vmem:[%s482 + $0x139] sm:$0xff]
        %v542 = vld [vmem:[%s482 + $0x141] sm:$0xff]
        %v543 = vld [vmem:[%s482 + $0x151] sm:$0xff]
        %v544 = vld [vmem:[%s482 + $0x159] sm:$0xff]
        %v545 = vld [vmem:[%s482 + $0x169] sm:$0xff]
        %v546 = vld [vmem:[%s482 + $0x171] sm:$0xff]
        %v547 = vld [vmem:[%s482 + $0x2] sm:$0xff]
        %v548 = vld [vmem:[%s482 + $0xa] sm:$0xff]
        %v549 = vld [vmem:[%s482 + $0x1a] sm:$0xff]
        %v550 = vld [vmem:[%s482 + $0x22] sm:$0xff]
        %v551 = vld [vmem:[%s482 + $0x32] sm:$0xff]
        %v552 = vld [vmem:[%s482 + $0x3a] sm:$0xff]
        %v553 = vld [vmem:[%s482 + $0x4a] sm:$0xff]
        %v554 = vld [vmem:[%s482 + $0x52] sm:$0xff]
        %v555 = vld [vmem:[%s482 + $0x62] sm:$0xff]
        %v556 = vld [vmem:[%s482 + $0x6a] sm:$0xff]
        %v557 = vld [vmem:[%s482 + $0x7a] sm:$0xff]
        %v558 = vld [vmem:[%s482 + $0x82] sm:$0xff]
        %v559 = vld [vmem:[%s482 + $0x92] sm:$0xff]
        %v560 = vld [vmem:[%s482 + $0x9a] sm:$0xff]
        %v561 = vld [vmem:[%s482 + $0xaa] sm:$0xff]
        %v562 = vld [vmem:[%s482 + $0xb2] sm:$0xff]
        %v563 = vld [vmem:[%s482 + $0xc2] sm:$0xff]
        %v564 = vld [vmem:[%s482 + $0xca] sm:$0xff]
        %v565 = vld [vmem:[%s482 + $0xda] sm:$0xff]
        %v566 = vld [vmem:[%s482 + $0xe2] sm:$0xff]
        %v567 = vld [vmem:[%s482 + $0xf2] sm:$0xff]
        %v568 = vld [vmem:[%s482 + $0xfa] sm:$0xff]
        %v569 = vld [vmem:[%s482 + $0x10a] sm:$0xff]
        %v570 = vld [vmem:[%s482 + $0x112] sm:$0xff]
        %v571 = vld [vmem:[%s482 + $0x122] sm:$0xff]
        %v572 = vld [vmem:[%s482 + $0x12a] sm:$0xff]
        %v573 = vld [vmem:[%s482 + $0x13a] sm:$0xff]
        %v574 = vld [vmem:[%s482 + $0x142] sm:$0xff]
        %v575 = vld [vmem:[%s482 + $0x152] sm:$0xff]
        %v576 = vld [vmem:[%s482 + $0x15a] sm:$0xff]
        %v577 = vld [vmem:[%s482 + $0x16a] sm:$0xff]
        %v578 = vld [vmem:[%s482 + $0x172] sm:$0xff]
        %v579 = vld [vmem:[%s2] sm:$0x1]
        %612 = vrot.lane.b32.xlu0 %v322, 8
        %v613 = vpop.permute.xlu0 %612
        %614 = vrot.lane.b32.xlu0 %v323, 8
        %v615 = vpop.permute.xlu0 %614
        %616 = vrot.lane.b32.xlu0 %v324, 8
        %v617 = vpop.permute.xlu0 %616
        %618 = vrot.lane.b32.xlu0 %v325, 8
        %v619 = vpop.permute.xlu0 %618
        %620 = vrot.lane.b32.xlu0 %v326, 8
        %v621 = vpop.permute.xlu0 %620
        %622 = vrot.lane.b32.xlu0 %v327, 8
        %v623 = vpop.permute.xlu0 %622
        %624 = vrot.lane.b32.xlu0 %v328, 8
        %v625 = vpop.permute.xlu0 %624
        %626 = vrot.lane.b32.xlu0 %v329, 8
        %v627 = vpop.permute.xlu0 %626
        %628 = vrot.lane.b32.xlu0 %v330, 8
        %v629 = vpop.permute.xlu0 %628
        %630 = vrot.lane.b32.xlu0 %v331, 8
        %v631 = vpop.permute.xlu0 %630
        %632 = vrot.lane.b32.xlu0 %v332, 8
        %v633 = vpop.permute.xlu0 %632
        %634 = vrot.lane.b32.xlu0 %v333, 8
        %v635 = vpop.permute.xlu0 %634
        %636 = vrot.lane.b32.xlu0 %v334, 8
        %v637 = vpop.permute.xlu0 %636
        %638 = vrot.lane.b32.xlu0 %v335, 8
        %v639 = vpop.permute.xlu0 %638
        %640 = vrot.lane.b32.xlu0 %v336, 8
        %v641 = vpop.permute.xlu0 %640
        %642 = vrot.lane.b32.xlu0 %v337, 8
        %v643 = vpop.permute.xlu0 %642
        %644 = vrot.lane.b32.xlu0 %v338, 8
        %v645 = vpop.permute.xlu0 %644
        %646 = vrot.lane.b32.xlu0 %v339, 8
        %v647 = vpop.permute.xlu0 %646
        %648 = vrot.lane.b32.xlu0 %v340, 8
        %v649 = vpop.permute.xlu0 %648
        %650 = vrot.lane.b32.xlu0 %v341, 8
        %v651 = vpop.permute.xlu0 %650
        %652 = vrot.lane.b32.xlu0 %v342, 8
        %v653 = vpop.permute.xlu0 %652
        %654 = vrot.lane.b32.xlu0 %v343, 8
        %v655 = vpop.permute.xlu0 %654
        %656 = vrot.lane.b32.xlu0 %v344, 8
        %v657 = vpop.permute.xlu0 %656
        %658 = vrot.lane.b32.xlu0 %v345, 8
        %v659 = vpop.permute.xlu0 %658
        %660 = vrot.lane.b32.xlu0 %v346, 8
        %v661 = vpop.permute.xlu0 %660
        %662 = vrot.lane.b32.xlu0 %v347, 8
        %v663 = vpop.permute.xlu0 %662
        %664 = vrot.lane.b32.xlu0 %v348, 8
        %v665 = vpop.permute.xlu0 %664
        %666 = vrot.lane.b32.xlu0 %v349, 8
        %v667 = vpop.permute.xlu0 %666
        %668 = vrot.lane.b32.xlu0 %v350, 8
        %v669 = vpop.permute.xlu0 %668
        %670 = vrot.lane.b32.xlu0 %v351, 8
        %v671 = vpop.permute.xlu0 %670
        %672 = vrot.lane.b32.xlu0 %v352, 8
        %v673 = vpop.permute.xlu0 %672
        %674 = vrot.lane.b32.xlu0 %v353, 8
        %v675 = vpop.permute.xlu0 %674
        %740 = vrot.lane.b32.xlu0 %v386, 16
        %v741 = vpop.permute.xlu0 %740
        %742 = vrot.lane.b32.xlu0 %v387, 16
        %v743 = vpop.permute.xlu0 %742
        %744 = vrot.lane.b32.xlu0 %v388, 16
        %v745 = vpop.permute.xlu0 %744
        %746 = vrot.lane.b32.xlu0 %v389, 16
        %v747 = vpop.permute.xlu0 %746
        %748 = vrot.lane.b32.xlu0 %v390, 16
        %v749 = vpop.permute.xlu0 %748
        %750 = vrot.lane.b32.xlu0 %v391, 16
        %v751 = vpop.permute.xlu0 %750
        %752 = vrot.lane.b32.xlu0 %v392, 16
        %v753 = vpop.permute.xlu0 %752
        %754 = vrot.lane.b32.xlu0 %v393, 16
        %v755 = vpop.permute.xlu0 %754
        %756 = vrot.lane.b32.xlu0 %v394, 16
        %v757 = vpop.permute.xlu0 %756
        %758 = vrot.lane.b32.xlu0 %v395, 16
        %v759 = vpop.permute.xlu0 %758
        %760 = vrot.lane.b32.xlu0 %v396, 16
        %v761 = vpop.permute.xlu0 %760
        %762 = vrot.lane.b32.xlu0 %v397, 16
        %v763 = vpop.permute.xlu0 %762
        %764 = vrot.lane.b32.xlu0 %v398, 16
        %v765 = vpop.permute.xlu0 %764
        %766 = vrot.lane.b32.xlu0 %v399, 16
        %v767 = vpop.permute.xlu0 %766
        %768 = vrot.lane.b32.xlu0 %v400, 16
        %v769 = vpop.permute.xlu0 %768
        %770 = vrot.lane.b32.xlu0 %v401, 16
        %v771 = vpop.permute.xlu0 %770
        %772 = vrot.lane.b32.xlu0 %v402, 16
        %v773 = vpop.permute.xlu0 %772
        %774 = vrot.lane.b32.xlu0 %v403, 16
        %v775 = vpop.permute.xlu0 %774
        %776 = vrot.lane.b32.xlu0 %v404, 16
        %v777 = vpop.permute.xlu0 %776
        %778 = vrot.lane.b32.xlu0 %v405, 16
        %v779 = vpop.permute.xlu0 %778
        %780 = vrot.lane.b32.xlu0 %v406, 16
        %v781 = vpop.permute.xlu0 %780
        %782 = vrot.lane.b32.xlu0 %v407, 16
        %v783 = vpop.permute.xlu0 %782
        %784 = vrot.lane.b32.xlu0 %v408, 16
        %v785 = vpop.permute.xlu0 %784
        %786 = vrot.lane.b32.xlu0 %v409, 16
        %v787 = vpop.permute.xlu0 %786
        %788 = vrot.lane.b32.xlu0 %v410, 16
        %v789 = vpop.permute.xlu0 %788
        %790 = vrot.lane.b32.xlu0 %v411, 16
        %v791 = vpop.permute.xlu0 %790
        %792 = vrot.lane.b32.xlu0 %v412, 16
        %v793 = vpop.permute.xlu0 %792
        %794 = vrot.lane.b32.xlu0 %v413, 16
        %v795 = vpop.permute.xlu0 %794
        %796 = vrot.lane.b32.xlu0 %v414, 16
        %v797 = vpop.permute.xlu0 %796
        %798 = vrot.lane.b32.xlu0 %v415, 16
        %v799 = vpop.permute.xlu0 %798
        %800 = vrot.lane.b32.xlu0 %v416, 16
        %v801 = vpop.permute.xlu0 %800
        %802 = vrot.lane.b32.xlu0 %v417, 16
        %v803 = vpop.permute.xlu0 %802
        %868 = vrot.lane.b32.xlu0 %v418, 24
        %v869 = vpop.permute.xlu0 %868
        %870 = vrot.lane.b32.xlu0 %v419, 24
        %v871 = vpop.permute.xlu0 %870
        %872 = vrot.lane.b32.xlu0 %v420, 24
        %v873 = vpop.permute.xlu0 %872
        %874 = vrot.lane.b32.xlu0 %v421, 24
        %v875 = vpop.permute.xlu0 %874
        %876 = vrot.lane.b32.xlu0 %v422, 24
        %v877 = vpop.permute.xlu0 %876
        %878 = vrot.lane.b32.xlu0 %v423, 24
        %v879 = vpop.permute.xlu0 %878
        %880 = vrot.lane.b32.xlu0 %v424, 24
        %v881 = vpop.permute.xlu0 %880
        %882 = vrot.lane.b32.xlu0 %v425, 24
        %v883 = vpop.permute.xlu0 %882
        %884 = vrot.lane.b32.xlu0 %v426, 24
        %v885 = vpop.permute.xlu0 %884
        %886 = vrot.lane.b32.xlu0 %v427, 24
        %v887 = vpop.permute.xlu0 %886
        %888 = vrot.lane.b32.xlu0 %v428, 24
        %v889 = vpop.permute.xlu0 %888
        %890 = vrot.lane.b32.xlu0 %v429, 24
        %v891 = vpop.permute.xlu0 %890
        %892 = vrot.lane.b32.xlu0 %v430, 24
        %v893 = vpop.permute.xlu0 %892
        %894 = vrot.lane.b32.xlu0 %v431, 24
        %v895 = vpop.permute.xlu0 %894
        %896 = vrot.lane.b32.xlu0 %v432, 24
        %v897 = vpop.permute.xlu0 %896
        %898 = vrot.lane.b32.xlu0 %v433, 24
        %v899 = vpop.permute.xlu0 %898
        %900 = vrot.lane.b32.xlu0 %v434, 24
        %v901 = vpop.permute.xlu0 %900
        %902 = vrot.lane.b32.xlu0 %v435, 24
        %v903 = vpop.permute.xlu0 %902
        %904 = vrot.lane.b32.xlu0 %v436, 24
        %v905 = vpop.permute.xlu0 %904
        %906 = vrot.lane.b32.xlu0 %v437, 24
        %v907 = vpop.permute.xlu0 %906
        %908 = vrot.lane.b32.xlu0 %v438, 24
        %v909 = vpop.permute.xlu0 %908
        %910 = vrot.lane.b32.xlu0 %v439, 24
        %v911 = vpop.permute.xlu0 %910
        %912 = vrot.lane.b32.xlu0 %v440, 24
        %v913 = vpop.permute.xlu0 %912
        %914 = vrot.lane.b32.xlu0 %v441, 24
        %v915 = vpop.permute.xlu0 %914
        %916 = vrot.lane.b32.xlu0 %v442, 24
        %v917 = vpop.permute.xlu0 %916
        %918 = vrot.lane.b32.xlu0 %v443, 24
        %v919 = vpop.permute.xlu0 %918
        %920 = vrot.lane.b32.xlu0 %v444, 24
        %v921 = vpop.permute.xlu0 %920
        %922 = vrot.lane.b32.xlu0 %v445, 24
        %v923 = vpop.permute.xlu0 %922
        %924 = vrot.lane.b32.xlu0 %v446, 24
        %v925 = vpop.permute.xlu0 %924
        %926 = vrot.lane.b32.xlu0 %v447, 24
        %v927 = vpop.permute.xlu0 %926
        %928 = vrot.lane.b32.xlu0 %v448, 24
        %v929 = vpop.permute.xlu0 %928
        %930 = vrot.lane.b32.xlu0 %v449, 24
        %v931 = vpop.permute.xlu0 %930
        %v964 = vsel %vm169, %v290, %v613
        %v965 = vsel %vm169, %v291, %v615
        %v966 = vsel %vm169, %v292, %v617
        %v967 = vsel %vm169, %v293, %v619
        %v968 = vsel %vm169, %v294, %v621
        %v969 = vsel %vm169, %v295, %v623
        %v970 = vsel %vm169, %v296, %v625
        %v971 = vsel %vm169, %v297, %v627
        %v972 = vsel %vm169, %v298, %v629
        %v973 = vsel %vm169, %v299, %v631
        %v974 = vsel %vm169, %v300, %v633
        %v975 = vsel %vm169, %v301, %v635
        %v976 = vsel %vm169, %v302, %v637
        %v977 = vsel %vm169, %v303, %v639
        %v978 = vsel %vm169, %v304, %v641
        %v979 = vsel %vm169, %v305, %v643
        %v980 = vsel %vm169, %v306, %v645
        %v981 = vsel %vm169, %v307, %v647
        %v982 = vsel %vm169, %v308, %v649
        %v983 = vsel %vm169, %v309, %v651
        %v984 = vsel %vm169, %v310, %v653
        %v985 = vsel %vm169, %v311, %v655
        %v986 = vsel %vm169, %v312, %v657
        %v987 = vsel %vm169, %v313, %v659
        %v988 = vsel %vm169, %v314, %v661
        %v989 = vsel %vm169, %v315, %v663
        %v990 = vsel %vm169, %v316, %v665
        %v991 = vsel %vm169, %v317, %v667
        %v992 = vsel %vm169, %v318, %v669
        %v993 = vsel %vm169, %v319, %v671
        %v994 = vsel %vm169, %v320, %v673
        %v995 = vsel %vm169, %v321, %v675
        %vm996 = vcmask 130048
        %v997 = vsel %vm996, %v964, %v741
        %v998 = vsel %vm996, %v965, %v743
        %v999 = vsel %vm996, %v966, %v745
        %v1000 = vsel %vm996, %v967, %v747
        %v1001 = vsel %vm996, %v968, %v749
        %v1002 = vsel %vm996, %v969, %v751
        %v1003 = vsel %vm996, %v970, %v753
        %v1004 = vsel %vm996, %v971, %v755
        %v1005 = vsel %vm996, %v972, %v757
        %v1006 = vsel %vm996, %v973, %v759
        %v1007 = vsel %vm996, %v974, %v761
        %v1008 = vsel %vm996, %v975, %v763
        %v1009 = vsel %vm996, %v976, %v765
        %v1010 = vsel %vm996, %v977, %v767
        %v1011 = vsel %vm996, %v978, %v769
        %v1012 = vsel %vm996, %v979, %v771
        %v1013 = vsel %vm996, %v980, %v773
        %v1014 = vsel %vm996, %v981, %v775
        %v1015 = vsel %vm996, %v982, %v777
        %v1016 = vsel %vm996, %v983, %v779
        %v1017 = vsel %vm996, %v984, %v781
        %v1018 = vsel %vm996, %v985, %v783
        %v1019 = vsel %vm996, %v986, %v785
        %v1020 = vsel %vm996, %v987, %v787
        %v1021 = vsel %vm996, %v988, %v789
        %v1022 = vsel %vm996, %v989, %v791
        %v1023 = vsel %vm996, %v990, %v793
        %v1024 = vsel %vm996, %v991, %v795
        %v1025 = vsel %vm996, %v992, %v797
        %v1026 = vsel %vm996, %v993, %v799
        %v1027 = vsel %vm996, %v994, %v801
        %v1028 = vsel %vm996, %v995, %v803
        %vm1029 = vcmask 195584
        %v1030 = vsel %vm1029, %v997, %v869
        %v1031 = vsel %vm1029, %v998, %v871
        %v1032 = vsel %vm1029, %v999, %v873
        %v1033 = vsel %vm1029, %v1000, %v875
        %v1034 = vsel %vm1029, %v1001, %v877
        %v1035 = vsel %vm1029, %v1002, %v879
        %v1036 = vsel %vm1029, %v1003, %v881
        %v1037 = vsel %vm1029, %v1004, %v883
        %v1038 = vsel %vm1029, %v1005, %v885
        %v1039 = vsel %vm1029, %v1006, %v887
        %v1040 = vsel %vm1029, %v1007, %v889
        %v1041 = vsel %vm1029, %v1008, %v891
        %v1042 = vsel %vm1029, %v1009, %v893
        %v1043 = vsel %vm1029, %v1010, %v895
        %v1044 = vsel %vm1029, %v1011, %v897
        %v1045 = vsel %vm1029, %v1012, %v899
        %v1046 = vsel %vm1029, %v1013, %v901
        %v1047 = vsel %vm1029, %v1014, %v903
        %v1048 = vsel %vm1029, %v1015, %v905
        %v1049 = vsel %vm1029, %v1016, %v907
        %v1050 = vsel %vm1029, %v1017, %v909
        %v1051 = vsel %vm1029, %v1018, %v911
        %v1052 = vsel %vm1029, %v1019, %v913
        %v1053 = vsel %vm1029, %v1020, %v915
        %v1054 = vsel %vm1029, %v1021, %v917
        %v1055 = vsel %vm1029, %v1022, %v919
        %v1056 = vsel %vm1029, %v1023, %v921
        %v1057 = vsel %vm1029, %v1024, %v923
        %v1058 = vsel %vm1029, %v1025, %v925
        %v1059 = vsel %vm1029, %v1026, %v927
        %v1060 = vsel %vm1029, %v1027, %v929
        %v1061 = vsel %vm1029, %v1028, %v931
        %v1062 = vld [vmem:[%s1] sm:$0xff]
        %v1063 = vld [vmem:[%s1 + $0x8] sm:$0xff]
        %v1064 = vld [vmem:[%s1 + $0x10] sm:$0xff]
        %v1065 = vld [vmem:[%s1 + $0x18] sm:$0xff]
        %v1067 = vperm.slane %v579, 0
        %vm1069 = vcmask 261120
        %v1071 = vsel %vm1069, %v1030, 0
        %v1074 = vsel %vm1069, %v1031, 0
        %v1077 = vsel %vm1069, %v1032, 0
        %v1080 = vsel %vm1069, %v1033, 0
        %v1083 = vsel %vm1069, %v1034, 0
        %v1086 = vsel %vm1069, %v1035, 0
        %v1089 = vsel %vm1069, %v1036, 0
        %v1092 = vsel %vm1069, %v1037, 0
        %v1095 = vsel %vm1069, %v1038, 0
        %v1098 = vsel %vm1069, %v1039, 0
        %v1101 = vsel %vm1069, %v1040, 0
        %v1104 = vsel %vm1069, %v1041, 0
        %v1107 = vsel %vm1069, %v1042, 0
        %v1110 = vsel %vm1069, %v1043, 0
        %v1113 = vsel %vm1069, %v1044, 0
        %v1116 = vsel %vm1069, %v1045, 0
        %v1119 = vsel %vm1069, %v1046, 0
        %v1122 = vsel %vm1069, %v1047, 0
        %v1125 = vsel %vm1069, %v1048, 0
        %v1128 = vsel %vm1069, %v1049, 0
        %v1131 = vsel %vm1069, %v1050, 0
        %v1134 = vsel %vm1069, %v1051, 0
        %v1137 = vsel %vm1069, %v1052, 0
        %v1140 = vsel %vm1069, %v1053, 0
        %v1143 = vsel %vm1069, %v1054, 0
        %v1146 = vsel %vm1069, %v1055, 0
        %v1149 = vsel %vm1069, %v1056, 0
        %v1152 = vsel %vm1069, %v1057, 0
        %v1155 = vsel %vm1069, %v1058, 0
        %v1158 = vsel %vm1069, %v1059, 0
        %v1161 = vsel %vm1069, %v1060, 0
        %v1164 = vsel %vm1069, %v1061, 0
        %1166 = vmatpush.msra.mxu0 0.0
        %1167 = vmatpush.msra.mxu0 0.0
        %1168 = vmatpush.msra.mxu0 0.0
        %1169 = vmatpush.msra.mxu0 0.0
        %1170 = vmatpush.msra.mxu0 0.0
        %1171 = vmatpush.msra.mxu0 0.0
        %1172 = vmatpush.msra.mxu0 0.0
        %1173 = vmatpush.msra.mxu0 0.0
        %1174 = vmatpush.msra.mxu0 0.0
        %1175 = vmatpush.msra.mxu0 0.0
        %1176 = vmatpush.msra.mxu0 0.0
        %1177 = vmatpush.msra.mxu0 0.0
        %1178 = vmatpush.msra.mxu0 %v1065
        %1179 = vmatpush.msra.mxu0 %v1064
        %1180 = vmatpush.msra.mxu0 %v1063
        %1181 = vmatpush.msra.mxu0 %v1062
        %1182 = vmatmul.f32.gmra.mxu0 %v1071
        %v1183 = vpop.f32.mrf.mxu0
        %v1184 = vadd.f32 %v1067, %v1183
        %1185 = vmatmul.f32.gmra.mxu0 %v1074
        %v1186 = vpop.f32.mrf.mxu0
        %v1187 = vadd.f32 %v1067, %v1186
        %1188 = vmatmul.f32.gmra.mxu0 %v1077
        %v1189 = vpop.f32.mrf.mxu0
        %v1190 = vadd.f32 %v1067, %v1189
        %1191 = vmatmul.f32.gmra.mxu0 %v1080
        %v1192 = vpop.f32.mrf.mxu0
        %v1193 = vadd.f32 %v1067, %v1192
        %1194 = vmatmul.f32.gmra.mxu0 %v1083
        %v1195 = vpop.f32.mrf.mxu0
        %v1196 = vadd.f32 %v1067, %v1195
        %1197 = vmatmul.f32.gmra.mxu0 %v1086
        %v1198 = vpop.f32.mrf.mxu0
        %v1199 = vadd.f32 %v1067, %v1198
        %1200 = vmatmul.f32.gmra.mxu0 %v1089
        %v1201 = vpop.f32.mrf.mxu0
        %v1202 = vadd.f32 %v1067, %v1201
        %1203 = vmatmul.f32.gmra.mxu0 %v1092
        %v1204 = vpop.f32.mrf.mxu0
        %v1205 = vadd.f32 %v1067, %v1204
        %1206 = vmatmul.f32.gmra.mxu0 %v1095
        %v1207 = vpop.f32.mrf.mxu0
        %v1208 = vadd.f32 %v1067, %v1207
        %1209 = vmatmul.f32.gmra.mxu0 %v1098
        %v1210 = vpop.f32.mrf.mxu0
        %v1211 = vadd.f32 %v1067, %v1210
        %1212 = vmatmul.f32.gmra.mxu0 %v1101
        %v1213 = vpop.f32.mrf.mxu0
        %v1214 = vadd.f32 %v1067, %v1213
        %1215 = vmatmul.f32.gmra.mxu0 %v1104
        %v1216 = vpop.f32.mrf.mxu0
        %v1217 = vadd.f32 %v1067, %v1216
        %1218 = vmatmul.f32.gmra.mxu0 %v1107
        %v1219 = vpop.f32.mrf.mxu0
        %v1220 = vadd.f32 %v1067, %v1219
        %1221 = vmatmul.f32.gmra.mxu0 %v1110
        %v1222 = vpop.f32.mrf.mxu0
        %v1223 = vadd.f32 %v1067, %v1222
        %1224 = vmatmul.f32.gmra.mxu0 %v1113
        %v1225 = vpop.f32.mrf.mxu0
        %v1226 = vadd.f32 %v1067, %v1225
        %1227 = vmatmul.f32.gmra.mxu0 %v1116
        %v1228 = vpop.f32.mrf.mxu0
        %v1229 = vadd.f32 %v1067, %v1228
        %1230 = vmatmul.f32.gmra.mxu0 %v1119
        %v1231 = vpop.f32.mrf.mxu0
        %v1232 = vadd.f32 %v1067, %v1231
        %1233 = vmatmul.f32.gmra.mxu0 %v1122
        %v1234 = vpop.f32.mrf.mxu0
        %v1235 = vadd.f32 %v1067, %v1234
        %1236 = vmatmul.f32.gmra.mxu0 %v1125
        %v1237 = vpop.f32.mrf.mxu0
        %v1238 = vadd.f32 %v1067, %v1237
        %1239 = vmatmul.f32.gmra.mxu0 %v1128
        %v1240 = vpop.f32.mrf.mxu0
        %v1241 = vadd.f32 %v1067, %v1240
        %1242 = vmatmul.f32.gmra.mxu0 %v1131
        %v1243 = vpop.f32.mrf.mxu0
        %v1244 = vadd.f32 %v1067, %v1243
        %1245 = vmatmul.f32.gmra.mxu0 %v1134
        %v1246 = vpop.f32.mrf.mxu0
        %v1247 = vadd.f32 %v1067, %v1246
        %1248 = vmatmul.f32.gmra.mxu0 %v1137
        %v1249 = vpop.f32.mrf.mxu0
        %v1250 = vadd.f32 %v1067, %v1249
        %1251 = vmatmul.f32.gmra.mxu0 %v1140
        %v1252 = vpop.f32.mrf.mxu0
        %v1253 = vadd.f32 %v1067, %v1252
        %1254 = vmatmul.f32.gmra.mxu0 %v1143
        %v1255 = vpop.f32.mrf.mxu0
        %v1256 = vadd.f32 %v1067, %v1255
        %1257 = vmatmul.f32.gmra.mxu0 %v1146
        %v1258 = vpop.f32.mrf.mxu0
        %v1259 = vadd.f32 %v1067, %v1258
        %1260 = vmatmul.f32.gmra.mxu0 %v1149
        %v1261 = vpop.f32.mrf.mxu0
        %v1262 = vadd.f32 %v1067, %v1261
        %1263 = vmatmul.f32.gmra.mxu0 %v1152
        %v1264 = vpop.f32.mrf.mxu0
        %v1265 = vadd.f32 %v1067, %v1264
        %1266 = vmatmul.f32.gmra.mxu0 %v1155
        %v1267 = vpop.f32.mrf.mxu0
        %v1268 = vadd.f32 %v1067, %v1267
        %1269 = vmatmul.f32.gmra.mxu0 %v1158
        %v1270 = vpop.f32.mrf.mxu0
        %v1271 = vadd.f32 %v1067, %v1270
        %1272 = vmatmul.f32.gmra.mxu0 %v1161
        %v1273 = vpop.f32.mrf.mxu0
        %v1274 = vadd.f32 %v1067, %v1273
        %1275 = vmatmul.f32.gmra.mxu0 %v1164
        %v1276 = vpop.f32.mrf.mxu0
        %v1277 = vadd.f32 %v1067, %v1276
        %1278 = vdwg.mxu0
        %1279 = vst.msk [vmem:[%s163] sm:$0xff] %vm169, %v1184
        %1280 = vst.msk [vmem:[%s163 + $0x8] sm:$0xff] %vm169, %v1187
        %1281 = vst.msk [vmem:[%s163 + $0x20] sm:$0xff] %vm169, %v1190
        %1282 = vst.msk [vmem:[%s163 + $0x28] sm:$0xff] %vm169, %v1193
        %1283 = vst.msk [vmem:[%s163 + $0x40] sm:$0xff] %vm169, %v1196
        %1284 = vst.msk [vmem:[%s163 + $0x48] sm:$0xff] %vm169, %v1199
        %1285 = vst.msk [vmem:[%s163 + $0x60] sm:$0xff] %vm169, %v1202
        %1286 = vst.msk [vmem:[%s163 + $0x68] sm:$0xff] %vm169, %v1205
        %1287 = vst.msk [vmem:[%s163 + $0x80] sm:$0xff] %vm169, %v1208
        %1288 = vst.msk [vmem:[%s163 + $0x88] sm:$0xff] %vm169, %v1211
        %1289 = vst.msk [vmem:[%s163 + $0xa0] sm:$0xff] %vm169, %v1214
        %1290 = vst.msk [vmem:[%s163 + $0xa8] sm:$0xff] %vm169, %v1217
        %1291 = vst.msk [vmem:[%s163 + $0xc0] sm:$0xff] %vm169, %v1220
        %1292 = vst.msk [vmem:[%s163 + $0xc8] sm:$0xff] %vm169, %v1223
        %1293 = vst.msk [vmem:[%s163 + $0xe0] sm:$0xff] %vm169, %v1226
        %1294 = vst.msk [vmem:[%s163 + $0xe8] sm:$0xff] %vm169, %v1229
        %1295 = vst.msk [vmem:[%s163 + $0x100] sm:$0xff] %vm169, %v1232
        %1296 = vst.msk [vmem:[%s163 + $0x108] sm:$0xff] %vm169, %v1235
        %1297 = vst.msk [vmem:[%s163 + $0x120] sm:$0xff] %vm169, %v1238
        %1298 = vst.msk [vmem:[%s163 + $0x128] sm:$0xff] %vm169, %v1241
        %1299 = vst.msk [vmem:[%s163 + $0x140] sm:$0xff] %vm169, %v1244
        %1300 = vst.msk [vmem:[%s163 + $0x148] sm:$0xff] %vm169, %v1247
        %1301 = vst.msk [vmem:[%s163 + $0x160] sm:$0xff] %vm169, %v1250
        %1302 = vst.msk [vmem:[%s163 + $0x168] sm:$0xff] %vm169, %v1253
        %1303 = vst.msk [vmem:[%s163 + $0x180] sm:$0xff] %vm169, %v1256
        %1304 = vst.msk [vmem:[%s163 + $0x188] sm:$0xff] %vm169, %v1259
        %1305 = vst.msk [vmem:[%s163 + $0x1a0] sm:$0xff] %vm169, %v1262
        %1306 = vst.msk [vmem:[%s163 + $0x1a8] sm:$0xff] %vm169, %v1265
        %1307 = vst.msk [vmem:[%s163 + $0x1c0] sm:$0xff] %vm169, %v1268
        %1308 = vst.msk [vmem:[%s163 + $0x1c8] sm:$0xff] %vm169, %v1271
        %1309 = vst.msk [vmem:[%s163 + $0x1e0] sm:$0xff] %vm169, %v1274
        %1310 = vst.msk [vmem:[%s163 + $0x1e8] sm:$0xff] %vm169, %v1277
        %1343 = vrot.lane.b32.xlu0 %v354, 8
        %v1344 = vpop.permute.xlu0 %1343
        %1345 = vrot.lane.b32.xlu0 %v355, 8
        %v1346 = vpop.permute.xlu0 %1345
        %1347 = vrot.lane.b32.xlu0 %v356, 8
        %v1348 = vpop.permute.xlu0 %1347
        %1349 = vrot.lane.b32.xlu0 %v357, 8
        %v1350 = vpop.permute.xlu0 %1349
        %1351 = vrot.lane.b32.xlu0 %v358, 8
        %v1352 = vpop.permute.xlu0 %1351
        %1353 = vrot.lane.b32.xlu0 %v359, 8
        %v1354 = vpop.permute.xlu0 %1353
        %1355 = vrot.lane.b32.xlu0 %v360, 8
        %v1356 = vpop.permute.xlu0 %1355
        %1357 = vrot.lane.b32.xlu0 %v361, 8
        %v1358 = vpop.permute.xlu0 %1357
        %1359 = vrot.lane.b32.xlu0 %v362, 8
        %v1360 = vpop.permute.xlu0 %1359
        %1361 = vrot.lane.b32.xlu0 %v363, 8
        %v1362 = vpop.permute.xlu0 %1361
        %1363 = vrot.lane.b32.xlu0 %v364, 8
        %v1364 = vpop.permute.xlu0 %1363
        %1365 = vrot.lane.b32.xlu0 %v365, 8
        %v1366 = vpop.permute.xlu0 %1365
        %1367 = vrot.lane.b32.xlu0 %v366, 8
        %v1368 = vpop.permute.xlu0 %1367
        %1369 = vrot.lane.b32.xlu0 %v367, 8
        %v1370 = vpop.permute.xlu0 %1369
        %1371 = vrot.lane.b32.xlu0 %v368, 8
        %v1372 = vpop.permute.xlu0 %1371
        %1373 = vrot.lane.b32.xlu0 %v369, 8
        %v1374 = vpop.permute.xlu0 %1373
        %1375 = vrot.lane.b32.xlu0 %v370, 8
        %v1376 = vpop.permute.xlu0 %1375
        %1377 = vrot.lane.b32.xlu0 %v371, 8
        %v1378 = vpop.permute.xlu0 %1377
        %1379 = vrot.lane.b32.xlu0 %v372, 8
        %v1380 = vpop.permute.xlu0 %1379
        %1381 = vrot.lane.b32.xlu0 %v373, 8
        %v1382 = vpop.permute.xlu0 %1381
        %1383 = vrot.lane.b32.xlu0 %v374, 8
        %v1384 = vpop.permute.xlu0 %1383
        %1385 = vrot.lane.b32.xlu0 %v375, 8
        %v1386 = vpop.permute.xlu0 %1385
        %1387 = vrot.lane.b32.xlu0 %v376, 8
        %v1388 = vpop.permute.xlu0 %1387
        %1389 = vrot.lane.b32.xlu0 %v377, 8
        %v1390 = vpop.permute.xlu0 %1389
        %1391 = vrot.lane.b32.xlu0 %v378, 8
        %v1392 = vpop.permute.xlu0 %1391
        %1393 = vrot.lane.b32.xlu0 %v379, 8
        %v1394 = vpop.permute.xlu0 %1393
        %1395 = vrot.lane.b32.xlu0 %v380, 8
        %v1396 = vpop.permute.xlu0 %1395
        %1397 = vrot.lane.b32.xlu0 %v381, 8
        %v1398 = vpop.permute.xlu0 %1397
        %1399 = vrot.lane.b32.xlu0 %v382, 8
        %v1400 = vpop.permute.xlu0 %1399
        %1401 = vrot.lane.b32.xlu0 %v383, 8
        %v1402 = vpop.permute.xlu0 %1401
        %1403 = vrot.lane.b32.xlu0 %v384, 8
        %v1404 = vpop.permute.xlu0 %1403
        %1405 = vrot.lane.b32.xlu0 %v385, 8
        %v1406 = vpop.permute.xlu0 %1405
        %1439 = vrot.lane.b32.xlu0 %v418, 16
        %v1440 = vpop.permute.xlu0 %1439
        %1441 = vrot.lane.b32.xlu0 %v419, 16
        %v1442 = vpop.permute.xlu0 %1441
        %1443 = vrot.lane.b32.xlu0 %v420, 16
        %v1444 = vpop.permute.xlu0 %1443
        %1445 = vrot.lane.b32.xlu0 %v421, 16
        %v1446 = vpop.permute.xlu0 %1445
        %1447 = vrot.lane.b32.xlu0 %v422, 16
        %v1448 = vpop.permute.xlu0 %1447
        %1449 = vrot.lane.b32.xlu0 %v423, 16
        %v1450 = vpop.permute.xlu0 %1449
        %1451 = vrot.lane.b32.xlu0 %v424, 16
        %v1452 = vpop.permute.xlu0 %1451
        %1453 = vrot.lane.b32.xlu0 %v425, 16
        %v1454 = vpop.permute.xlu0 %1453
        %1455 = vrot.lane.b32.xlu0 %v426, 16
        %v1456 = vpop.permute.xlu0 %1455
        %1457 = vrot.lane.b32.xlu0 %v427, 16
        %v1458 = vpop.permute.xlu0 %1457
        %1459 = vrot.lane.b32.xlu0 %v428, 16
        %v1460 = vpop.permute.xlu0 %1459
        %1461 = vrot.lane.b32.xlu0 %v429, 16
        %v1462 = vpop.permute.xlu0 %1461
        %1463 = vrot.lane.b32.xlu0 %v430, 16
        %v1464 = vpop.permute.xlu0 %1463
        %1465 = vrot.lane.b32.xlu0 %v431, 16
        %v1466 = vpop.permute.xlu0 %1465
        %1467 = vrot.lane.b32.xlu0 %v432, 16
        %v1468 = vpop.permute.xlu0 %1467
        %1469 = vrot.lane.b32.xlu0 %v433, 16
        %v1470 = vpop.permute.xlu0 %1469
        %1471 = vrot.lane.b32.xlu0 %v434, 16
        %v1472 = vpop.permute.xlu0 %1471
        %1473 = vrot.lane.b32.xlu0 %v435, 16
        %v1474 = vpop.permute.xlu0 %1473
        %1475 = vrot.lane.b32.xlu0 %v436, 16
        %v1476 = vpop.permute.xlu0 %1475
        %1477 = vrot.lane.b32.xlu0 %v437, 16
        %v1478 = vpop.permute.xlu0 %1477
        %1479 = vrot.lane.b32.xlu0 %v438, 16
        %v1480 = vpop.permute.xlu0 %1479
        %1481 = vrot.lane.b32.xlu0 %v439, 16
        %v1482 = vpop.permute.xlu0 %1481
        %1483 = vrot.lane.b32.xlu0 %v440, 16
        %v1484 = vpop.permute.xlu0 %1483
        %1485 = vrot.lane.b32.xlu0 %v441, 16
        %v1486 = vpop.permute.xlu0 %1485
        %1487 = vrot.lane.b32.xlu0 %v442, 16
        %v1488 = vpop.permute.xlu0 %1487
        %1489 = vrot.lane.b32.xlu0 %v443, 16
        %v1490 = vpop.permute.xlu0 %1489
        %1491 = vrot.lane.b32.xlu0 %v444, 16
        %v1492 = vpop.permute.xlu0 %1491
        %1493 = vrot.lane.b32.xlu0 %v445, 16
        %v1494 = vpop.permute.xlu0 %1493
        %1495 = vrot.lane.b32.xlu0 %v446, 16
        %v1496 = vpop.permute.xlu0 %1495
        %1497 = vrot.lane.b32.xlu0 %v447, 16
        %v1498 = vpop.permute.xlu0 %1497
        %1499 = vrot.lane.b32.xlu0 %v448, 16
        %v1500 = vpop.permute.xlu0 %1499
        %1501 = vrot.lane.b32.xlu0 %v449, 16
        %v1502 = vpop.permute.xlu0 %1501
        %1567 = vrot.lane.b32.xlu0 %v450, 24
        %v1568 = vpop.permute.xlu0 %1567
        %1569 = vrot.lane.b32.xlu0 %v451, 24
        %v1570 = vpop.permute.xlu0 %1569
        %1571 = vrot.lane.b32.xlu0 %v452, 24
        %v1572 = vpop.permute.xlu0 %1571
        %1573 = vrot.lane.b32.xlu0 %v453, 24
        %v1574 = vpop.permute.xlu0 %1573
        %1575 = vrot.lane.b32.xlu0 %v454, 24
        %v1576 = vpop.permute.xlu0 %1575
        %1577 = vrot.lane.b32.xlu0 %v455, 24
        %v1578 = vpop.permute.xlu0 %1577
        %1579 = vrot.lane.b32.xlu0 %v456, 24
        %v1580 = vpop.permute.xlu0 %1579
        %1581 = vrot.lane.b32.xlu0 %v457, 24
        %v1582 = vpop.permute.xlu0 %1581
        %1583 = vrot.lane.b32.xlu0 %v458, 24
        %v1584 = vpop.permute.xlu0 %1583
        %1585 = vrot.lane.b32.xlu0 %v459, 24
        %v1586 = vpop.permute.xlu0 %1585
        %1587 = vrot.lane.b32.xlu0 %v460, 24
        %v1588 = vpop.permute.xlu0 %1587
        %1589 = vrot.lane.b32.xlu0 %v461, 24
        %v1590 = vpop.permute.xlu0 %1589
        %1591 = vrot.lane.b32.xlu0 %v462, 24
        %v1592 = vpop.permute.xlu0 %1591
        %1593 = vrot.lane.b32.xlu0 %v463, 24
        %v1594 = vpop.permute.xlu0 %1593
        %1595 = vrot.lane.b32.xlu0 %v464, 24
        %v1596 = vpop.permute.xlu0 %1595
        %1597 = vrot.lane.b32.xlu0 %v465, 24
        %v1598 = vpop.permute.xlu0 %1597
        %1599 = vrot.lane.b32.xlu0 %v466, 24
        %v1600 = vpop.permute.xlu0 %1599
        %1601 = vrot.lane.b32.xlu0 %v467, 24
        %v1602 = vpop.permute.xlu0 %1601
        %1603 = vrot.lane.b32.xlu0 %v468, 24
        %v1604 = vpop.permute.xlu0 %1603
        %1605 = vrot.lane.b32.xlu0 %v469, 24
        %v1606 = vpop.permute.xlu0 %1605
        %1607 = vrot.lane.b32.xlu0 %v470, 24
        %v1608 = vpop.permute.xlu0 %1607
        %1609 = vrot.lane.b32.xlu0 %v471, 24
        %v1610 = vpop.permute.xlu0 %1609
        %1611 = vrot.lane.b32.xlu0 %v472, 24
        %v1612 = vpop.permute.xlu0 %1611
        %1613 = vrot.lane.b32.xlu0 %v473, 24
        %v1614 = vpop.permute.xlu0 %1613
        %1615 = vrot.lane.b32.xlu0 %v474, 24
        %v1616 = vpop.permute.xlu0 %1615
        %1617 = vrot.lane.b32.xlu0 %v475, 24
        %v1618 = vpop.permute.xlu0 %1617
        %1619 = vrot.lane.b32.xlu0 %v476, 24
        %v1620 = vpop.permute.xlu0 %1619
        %1621 = vrot.lane.b32.xlu0 %v477, 24
        %v1622 = vpop.permute.xlu0 %1621
        %1623 = vrot.lane.b32.xlu0 %v478, 24
        %v1624 = vpop.permute.xlu0 %1623
        %1625 = vrot.lane.b32.xlu0 %v479, 24
        %v1626 = vpop.permute.xlu0 %1625
        %1627 = vrot.lane.b32.xlu0 %v480, 24
        %v1628 = vpop.permute.xlu0 %1627
        %1629 = vrot.lane.b32.xlu0 %v481, 24
        %v1630 = vpop.permute.xlu0 %1629
        %v1663 = vsel %vm169, %v322, %v1344
        %v1664 = vsel %vm169, %v323, %v1346
        %v1665 = vsel %vm169, %v324, %v1348
        %v1666 = vsel %vm169, %v325, %v1350
        %v1667 = vsel %vm169, %v326, %v1352
        %v1668 = vsel %vm169, %v327, %v1354
        %v1669 = vsel %vm169, %v328, %v1356
        %v1670 = vsel %vm169, %v329, %v1358
        %v1671 = vsel %vm169, %v330, %v1360
        %v1672 = vsel %vm169, %v331, %v1362
        %v1673 = vsel %vm169, %v332, %v1364
        %v1674 = vsel %vm169, %v333, %v1366
        %v1675 = vsel %vm169, %v334, %v1368
        %v1676 = vsel %vm169, %v335, %v1370
        %v1677 = vsel %vm169, %v336, %v1372
        %v1678 = vsel %vm169, %v337, %v1374
        %v1679 = vsel %vm169, %v338, %v1376
        %v1680 = vsel %vm169, %v339, %v1378
        %v1681 = vsel %vm169, %v340, %v1380
        %v1682 = vsel %vm169, %v341, %v1382
        %v1683 = vsel %vm169, %v342, %v1384
        %v1684 = vsel %vm169, %v343, %v1386
        %v1685 = vsel %vm169, %v344, %v1388
        %v1686 = vsel %vm169, %v345, %v1390
        %v1687 = vsel %vm169, %v346, %v1392
        %v1688 = vsel %vm169, %v347, %v1394
        %v1689 = vsel %vm169, %v348, %v1396
        %v1690 = vsel %vm169, %v349, %v1398
        %v1691 = vsel %vm169, %v350, %v1400
        %v1692 = vsel %vm169, %v351, %v1402
        %v1693 = vsel %vm169, %v352, %v1404
        %v1694 = vsel %vm169, %v353, %v1406
        %v1695 = vsel %vm996, %v1663, %v1440
        %v1696 = vsel %vm996, %v1664, %v1442
        %v1697 = vsel %vm996, %v1665, %v1444
        %v1698 = vsel %vm996, %v1666, %v1446
        %v1699 = vsel %vm996, %v1667, %v1448
        %v1700 = vsel %vm996, %v1668, %v1450
        %v1701 = vsel %vm996, %v1669, %v1452
        %v1702 = vsel %vm996, %v1670, %v1454
        %v1703 = vsel %vm996, %v1671, %v1456
        %v1704 = vsel %vm996, %v1672, %v1458
        %v1705 = vsel %vm996, %v1673, %v1460
        %v1706 = vsel %vm996, %v1674, %v1462
        %v1707 = vsel %vm996, %v1675, %v1464
        %v1708 = vsel %vm996, %v1676, %v1466
        %v1709 = vsel %vm996, %v1677, %v1468
        %v1710 = vsel %vm996, %v1678, %v1470
        %v1711 = vsel %vm996, %v1679, %v1472
        %v1712 = vsel %vm996, %v1680, %v1474
        %v1713 = vsel %vm996, %v1681, %v1476
        %v1714 = vsel %vm996, %v1682, %v1478
        %v1715 = vsel %vm996, %v1683, %v1480
        %v1716 = vsel %vm996, %v1684, %v1482
        %v1717 = vsel %vm996, %v1685, %v1484
        %v1718 = vsel %vm996, %v1686, %v1486
        %v1719 = vsel %vm996, %v1687, %v1488
        %v1720 = vsel %vm996, %v1688, %v1490
        %v1721 = vsel %vm996, %v1689, %v1492
        %v1722 = vsel %vm996, %v1690, %v1494
        %v1723 = vsel %vm996, %v1691, %v1496
        %v1724 = vsel %vm996, %v1692, %v1498
        %v1725 = vsel %vm996, %v1693, %v1500
        %v1726 = vsel %vm996, %v1694, %v1502
        %v1727 = vsel %vm1029, %v1695, %v1568
        %v1728 = vsel %vm1029, %v1696, %v1570
        %v1729 = vsel %vm1029, %v1697, %v1572
        %v1730 = vsel %vm1029, %v1698, %v1574
        %v1731 = vsel %vm1029, %v1699, %v1576
        %v1732 = vsel %vm1029, %v1700, %v1578
        %v1733 = vsel %vm1029, %v1701, %v1580
        %v1734 = vsel %vm1029, %v1702, %v1582
        %v1735 = vsel %vm1029, %v1703, %v1584
        %v1736 = vsel %vm1029, %v1704, %v1586
        %v1737 = vsel %vm1029, %v1705, %v1588
        %v1738 = vsel %vm1029, %v1706, %v1590
        %v1739 = vsel %vm1029, %v1707, %v1592
        %v1740 = vsel %vm1029, %v1708, %v1594
        %v1741 = vsel %vm1029, %v1709, %v1596
        %v1742 = vsel %vm1029, %v1710, %v1598
        %v1743 = vsel %vm1029, %v1711, %v1600
        %v1744 = vsel %vm1029, %v1712, %v1602
        %v1745 = vsel %vm1029, %v1713, %v1604
        %v1746 = vsel %vm1029, %v1714, %v1606
        %v1747 = vsel %vm1029, %v1715, %v1608
        %v1748 = vsel %vm1029, %v1716, %v1610
        %v1749 = vsel %vm1029, %v1717, %v1612
        %v1750 = vsel %vm1029, %v1718, %v1614
        %v1751 = vsel %vm1029, %v1719, %v1616
        %v1752 = vsel %vm1029, %v1720, %v1618
        %v1753 = vsel %vm1029, %v1721, %v1620
        %v1754 = vsel %vm1029, %v1722, %v1622
        %v1755 = vsel %vm1029, %v1723, %v1624
        %v1756 = vsel %vm1029, %v1724, %v1626
        %v1757 = vsel %vm1029, %v1725, %v1628
        %v1758 = vsel %vm1029, %v1726, %v1630
        %s1759 = scalar_lea.vmem %s1, 32
        %v1760 = vld [vmem:[%s1759] sm:$0xff]
        %v1761 = vld [vmem:[%s1759 + $0x8] sm:$0xff]
        %v1762 = vld [vmem:[%s1759 + $0x10] sm:$0xff]
        %v1763 = vld [vmem:[%s1759 + $0x18] sm:$0xff]
        %v1765 = vsel %vm1069, %v1727, 0
        %v1768 = vsel %vm1069, %v1728, 0
        %v1771 = vsel %vm1069, %v1729, 0
        %v1774 = vsel %vm1069, %v1730, 0
        %v1777 = vsel %vm1069, %v1731, 0
        %v1780 = vsel %vm1069, %v1732, 0
        %v1783 = vsel %vm1069, %v1733, 0
        %v1786 = vsel %vm1069, %v1734, 0
        %v1789 = vsel %vm1069, %v1735, 0
        %v1792 = vsel %vm1069, %v1736, 0
        %v1795 = vsel %vm1069, %v1737, 0
        %v1798 = vsel %vm1069, %v1738, 0
        %v1801 = vsel %vm1069, %v1739, 0
        %v1804 = vsel %vm1069, %v1740, 0
        %v1807 = vsel %vm1069, %v1741, 0
        %v1810 = vsel %vm1069, %v1742, 0
        %v1813 = vsel %vm1069, %v1743, 0
        %v1816 = vsel %vm1069, %v1744, 0
        %v1819 = vsel %vm1069, %v1745, 0
        %v1822 = vsel %vm1069, %v1746, 0
        %v1825 = vsel %vm1069, %v1747, 0
        %v1828 = vsel %vm1069, %v1748, 0
        %v1831 = vsel %vm1069, %v1749, 0
        %v1834 = vsel %vm1069, %v1750, 0
        %v1837 = vsel %vm1069, %v1751, 0
        %v1840 = vsel %vm1069, %v1752, 0
        %v1843 = vsel %vm1069, %v1753, 0
        %v1846 = vsel %vm1069, %v1754, 0
        %v1849 = vsel %vm1069, %v1755, 0
        %v1852 = vsel %vm1069, %v1756, 0
        %v1855 = vsel %vm1069, %v1757, 0
        %v1858 = vsel %vm1069, %v1758, 0
        %1860 = vmatpush.msra.mxu0 0.0
        %1861 = vmatpush.msra.mxu0 0.0
        %1862 = vmatpush.msra.mxu0 0.0
        %1863 = vmatpush.msra.mxu0 0.0
        %1864 = vmatpush.msra.mxu0 0.0
        %1865 = vmatpush.msra.mxu0 0.0
        %1866 = vmatpush.msra.mxu0 0.0
        %1867 = vmatpush.msra.mxu0 0.0
        %1868 = vmatpush.msra.mxu0 0.0
        %1869 = vmatpush.msra.mxu0 0.0
        %1870 = vmatpush.msra.mxu0 0.0
        %1871 = vmatpush.msra.mxu0 0.0
        %1872 = vmatpush.msra.mxu0 %v1763
        %1873 = vmatpush.msra.mxu0 %v1762
        %1874 = vmatpush.msra.mxu0 %v1761
        %1875 = vmatpush.msra.mxu0 %v1760
        %1876 = vmatmul.f32.gmra.mxu0 %v1765
        %v1877 = vpop.f32.mrf.mxu0
        %v1878 = vadd.f32 %v1067, %v1877
        %1879 = vmatmul.f32.gmra.mxu0 %v1768
        %v1880 = vpop.f32.mrf.mxu0
        %v1881 = vadd.f32 %v1067, %v1880
        %1882 = vmatmul.f32.gmra.mxu0 %v1771
        %v1883 = vpop.f32.mrf.mxu0
        %v1884 = vadd.f32 %v1067, %v1883
        %1885 = vmatmul.f32.gmra.mxu0 %v1774
        %v1886 = vpop.f32.mrf.mxu0
        %v1887 = vadd.f32 %v1067, %v1886
        %1888 = vmatmul.f32.gmra.mxu0 %v1777
        %v1889 = vpop.f32.mrf.mxu0
        %v1890 = vadd.f32 %v1067, %v1889
        %1891 = vmatmul.f32.gmra.mxu0 %v1780
        %v1892 = vpop.f32.mrf.mxu0
        %v1893 = vadd.f32 %v1067, %v1892
        %1894 = vmatmul.f32.gmra.mxu0 %v1783
        %v1895 = vpop.f32.mrf.mxu0
        %v1896 = vadd.f32 %v1067, %v1895
        %1897 = vmatmul.f32.gmra.mxu0 %v1786
        %v1898 = vpop.f32.mrf.mxu0
        %v1899 = vadd.f32 %v1067, %v1898
        %1900 = vmatmul.f32.gmra.mxu0 %v1789
        %v1901 = vpop.f32.mrf.mxu0
        %v1902 = vadd.f32 %v1067, %v1901
        %1903 = vmatmul.f32.gmra.mxu0 %v1792
        %v1904 = vpop.f32.mrf.mxu0
        %v1905 = vadd.f32 %v1067, %v1904
        %1906 = vmatmul.f32.gmra.mxu0 %v1795
        %v1907 = vpop.f32.mrf.mxu0
        %v1908 = vadd.f32 %v1067, %v1907
        %1909 = vmatmul.f32.gmra.mxu0 %v1798
        %v1910 = vpop.f32.mrf.mxu0
        %v1911 = vadd.f32 %v1067, %v1910
        %1912 = vmatmul.f32.gmra.mxu0 %v1801
        %v1913 = vpop.f32.mrf.mxu0
        %v1914 = vadd.f32 %v1067, %v1913
        %1915 = vmatmul.f32.gmra.mxu0 %v1804
        %v1916 = vpop.f32.mrf.mxu0
        %v1917 = vadd.f32 %v1067, %v1916
        %1918 = vmatmul.f32.gmra.mxu0 %v1807
        %v1919 = vpop.f32.mrf.mxu0
        %v1920 = vadd.f32 %v1067, %v1919
        %1921 = vmatmul.f32.gmra.mxu0 %v1810
        %v1922 = vpop.f32.mrf.mxu0
        %v1923 = vadd.f32 %v1067, %v1922
        %1924 = vmatmul.f32.gmra.mxu0 %v1813
        %v1925 = vpop.f32.mrf.mxu0
        %v1926 = vadd.f32 %v1067, %v1925
        %1927 = vmatmul.f32.gmra.mxu0 %v1816
        %v1928 = vpop.f32.mrf.mxu0
        %v1929 = vadd.f32 %v1067, %v1928
        %1930 = vmatmul.f32.gmra.mxu0 %v1819
        %v1931 = vpop.f32.mrf.mxu0
        %v1932 = vadd.f32 %v1067, %v1931
        %1933 = vmatmul.f32.gmra.mxu0 %v1822
        %v1934 = vpop.f32.mrf.mxu0
        %v1935 = vadd.f32 %v1067, %v1934
        %1936 = vmatmul.f32.gmra.mxu0 %v1825
        %v1937 = vpop.f32.mrf.mxu0
        %v1938 = vadd.f32 %v1067, %v1937
        %1939 = vmatmul.f32.gmra.mxu0 %v1828
        %v1940 = vpop.f32.mrf.mxu0
        %v1941 = vadd.f32 %v1067, %v1940
        %1942 = vmatmul.f32.gmra.mxu0 %v1831
        %v1943 = vpop.f32.mrf.mxu0
        %v1944 = vadd.f32 %v1067, %v1943
        %1945 = vmatmul.f32.gmra.mxu0 %v1834
        %v1946 = vpop.f32.mrf.mxu0
        %v1947 = vadd.f32 %v1067, %v1946
        %1948 = vmatmul.f32.gmra.mxu0 %v1837
        %v1949 = vpop.f32.mrf.mxu0
        %v1950 = vadd.f32 %v1067, %v1949
        %1951 = vmatmul.f32.gmra.mxu0 %v1840
        %v1952 = vpop.f32.mrf.mxu0
        %v1953 = vadd.f32 %v1067, %v1952
        %1954 = vmatmul.f32.gmra.mxu0 %v1843
        %v1955 = vpop.f32.mrf.mxu0
        %v1956 = vadd.f32 %v1067, %v1955
        %1957 = vmatmul.f32.gmra.mxu0 %v1846
        %v1958 = vpop.f32.mrf.mxu0
        %v1959 = vadd.f32 %v1067, %v1958
        %1960 = vmatmul.f32.gmra.mxu0 %v1849
        %v1961 = vpop.f32.mrf.mxu0
        %v1962 = vadd.f32 %v1067, %v1961
        %1963 = vmatmul.f32.gmra.mxu0 %v1852
        %v1964 = vpop.f32.mrf.mxu0
        %v1965 = vadd.f32 %v1067, %v1964
        %1966 = vmatmul.f32.gmra.mxu0 %v1855
        %v1967 = vpop.f32.mrf.mxu0
        %v1968 = vadd.f32 %v1067, %v1967
        %1969 = vmatmul.f32.gmra.mxu0 %v1858
        %v1970 = vpop.f32.mrf.mxu0
        %v1971 = vadd.f32 %v1067, %v1970
        %1972 = vdwg.mxu0
        %2005 = vrot.lane.b32.xlu0 %v1878, 8
        %v2006 = vpop.permute.xlu0 %2005
        %2007 = vrot.lane.b32.xlu0 %v1881, 8
        %v2008 = vpop.permute.xlu0 %2007
        %2009 = vrot.lane.b32.xlu0 %v1884, 8
        %v2010 = vpop.permute.xlu0 %2009
        %2011 = vrot.lane.b32.xlu0 %v1887, 8
        %v2012 = vpop.permute.xlu0 %2011
        %2013 = vrot.lane.b32.xlu0 %v1890, 8
        %v2014 = vpop.permute.xlu0 %2013
        %2015 = vrot.lane.b32.xlu0 %v1893, 8
        %v2016 = vpop.permute.xlu0 %2015
        %2017 = vrot.lane.b32.xlu0 %v1896, 8
        %v2018 = vpop.permute.xlu0 %2017
        %2019 = vrot.lane.b32.xlu0 %v1899, 8
        %v2020 = vpop.permute.xlu0 %2019
        %2021 = vrot.lane.b32.xlu0 %v1902, 8
        %v2022 = vpop.permute.xlu0 %2021
        %2023 = vrot.lane.b32.xlu0 %v1905, 8
        %v2024 = vpop.permute.xlu0 %2023
        %2025 = vrot.lane.b32.xlu0 %v1908, 8
        %v2026 = vpop.permute.xlu0 %2025
        %2027 = vrot.lane.b32.xlu0 %v1911, 8
        %v2028 = vpop.permute.xlu0 %2027
        %2029 = vrot.lane.b32.xlu0 %v1914, 8
        %v2030 = vpop.permute.xlu0 %2029
        %2031 = vrot.lane.b32.xlu0 %v1917, 8
        %v2032 = vpop.permute.xlu0 %2031
        %2033 = vrot.lane.b32.xlu0 %v1920, 8
        %v2034 = vpop.permute.xlu0 %2033
        %2035 = vrot.lane.b32.xlu0 %v1923, 8
        %v2036 = vpop.permute.xlu0 %2035
        %2037 = vrot.lane.b32.xlu0 %v1926, 8
        %v2038 = vpop.permute.xlu0 %2037
        %2039 = vrot.lane.b32.xlu0 %v1929, 8
        %v2040 = vpop.permute.xlu0 %2039
        %2041 = vrot.lane.b32.xlu0 %v1932, 8
        %v2042 = vpop.permute.xlu0 %2041
        %2043 = vrot.lane.b32.xlu0 %v1935, 8
        %v2044 = vpop.permute.xlu0 %2043
        %2045 = vrot.lane.b32.xlu0 %v1938, 8
        %v2046 = vpop.permute.xlu0 %2045
        %2047 = vrot.lane.b32.xlu0 %v1941, 8
        %v2048 = vpop.permute.xlu0 %2047
        %2049 = vrot.lane.b32.xlu0 %v1944, 8
        %v2050 = vpop.permute.xlu0 %2049
        %2051 = vrot.lane.b32.xlu0 %v1947, 8
        %v2052 = vpop.permute.xlu0 %2051
        %2053 = vrot.lane.b32.xlu0 %v1950, 8
        %v2054 = vpop.permute.xlu0 %2053
        %2055 = vrot.lane.b32.xlu0 %v1953, 8
        %v2056 = vpop.permute.xlu0 %2055
        %2057 = vrot.lane.b32.xlu0 %v1956, 8
        %v2058 = vpop.permute.xlu0 %2057
        %2059 = vrot.lane.b32.xlu0 %v1959, 8
        %v2060 = vpop.permute.xlu0 %2059
        %2061 = vrot.lane.b32.xlu0 %v1962, 8
        %v2062 = vpop.permute.xlu0 %2061
        %2063 = vrot.lane.b32.xlu0 %v1965, 8
        %v2064 = vpop.permute.xlu0 %2063
        %2065 = vrot.lane.b32.xlu0 %v1968, 8
        %v2066 = vpop.permute.xlu0 %2065
        %2067 = vrot.lane.b32.xlu0 %v1971, 8
        %v2068 = vpop.permute.xlu0 %2067
        %vm2101 = vcmask 130112
        %2102 = vst.msk [vmem:[%s163] sm:$0xff] %vm2101, %v2006
        %2103 = vst.msk [vmem:[%s163 + $0x8] sm:$0xff] %vm2101, %v2008
        %2104 = vst.msk [vmem:[%s163 + $0x20] sm:$0xff] %vm2101, %v2010
        %2105 = vst.msk [vmem:[%s163 + $0x28] sm:$0xff] %vm2101, %v2012
        %2106 = vst.msk [vmem:[%s163 + $0x40] sm:$0xff] %vm2101, %v2014
        %2107 = vst.msk [vmem:[%s163 + $0x48] sm:$0xff] %vm2101, %v2016
        %2108 = vst.msk [vmem:[%s163 + $0x60] sm:$0xff] %vm2101, %v2018
        %2109 = vst.msk [vmem:[%s163 + $0x68] sm:$0xff] %vm2101, %v2020
        %2110 = vst.msk [vmem:[%s163 + $0x80] sm:$0xff] %vm2101, %v2022
        %2111 = vst.msk [vmem:[%s163 + $0x88] sm:$0xff] %vm2101, %v2024
        %2112 = vst.msk [vmem:[%s163 + $0xa0] sm:$0xff] %vm2101, %v2026
        %2113 = vst.msk [vmem:[%s163 + $0xa8] sm:$0xff] %vm2101, %v2028
        %2114 = vst.msk [vmem:[%s163 + $0xc0] sm:$0xff] %vm2101, %v2030
        %2115 = vst.msk [vmem:[%s163 + $0xc8] sm:$0xff] %vm2101, %v2032
        %2116 = vst.msk [vmem:[%s163 + $0xe0] sm:$0xff] %vm2101, %v2034
        %2117 = vst.msk [vmem:[%s163 + $0xe8] sm:$0xff] %vm2101, %v2036
        %2118 = vst.msk [vmem:[%s163 + $0x100] sm:$0xff] %vm2101, %v2038
        %2119 = vst.msk [vmem:[%s163 + $0x108] sm:$0xff] %vm2101, %v2040
        %2120 = vst.msk [vmem:[%s163 + $0x120] sm:$0xff] %vm2101, %v2042
        %2121 = vst.msk [vmem:[%s163 + $0x128] sm:$0xff] %vm2101, %v2044
        %2122 = vst.msk [vmem:[%s163 + $0x140] sm:$0xff] %vm2101, %v2046
        %2123 = vst.msk [vmem:[%s163 + $0x148] sm:$0xff] %vm2101, %v2048
        %2124 = vst.msk [vmem:[%s163 + $0x160] sm:$0xff] %vm2101, %v2050
        %2125 = vst.msk [vmem:[%s163 + $0x168] sm:$0xff] %vm2101, %v2052
        %2126 = vst.msk [vmem:[%s163 + $0x180] sm:$0xff] %vm2101, %v2054
        %2127 = vst.msk [vmem:[%s163 + $0x188] sm:$0xff] %vm2101, %v2056
        %2128 = vst.msk [vmem:[%s163 + $0x1a0] sm:$0xff] %vm2101, %v2058
        %2129 = vst.msk [vmem:[%s163 + $0x1a8] sm:$0xff] %vm2101, %v2060
        %2130 = vst.msk [vmem:[%s163 + $0x1c0] sm:$0xff] %vm2101, %v2062
        %2131 = vst.msk [vmem:[%s163 + $0x1c8] sm:$0xff] %vm2101, %v2064
        %2132 = vst.msk [vmem:[%s163 + $0x1e0] sm:$0xff] %vm2101, %v2066
        %2133 = vst.msk [vmem:[%s163 + $0x1e8] sm:$0xff] %vm2101, %v2068
        %2134 = vrot.lane.b32.xlu0 %v418, 8
        %v2135 = vpop.permute.xlu0 %2134
        %2136 = vrot.lane.b32.xlu0 %v419, 8
        %v2137 = vpop.permute.xlu0 %2136
        %2138 = vrot.lane.b32.xlu0 %v420, 8
        %v2139 = vpop.permute.xlu0 %2138
        %2140 = vrot.lane.b32.xlu0 %v421, 8
        %v2141 = vpop.permute.xlu0 %2140
        %2142 = vrot.lane.b32.xlu0 %v422, 8
        %v2143 = vpop.permute.xlu0 %2142
        %2144 = vrot.lane.b32.xlu0 %v423, 8
        %v2145 = vpop.permute.xlu0 %2144
        %2146 = vrot.lane.b32.xlu0 %v424, 8
        %v2147 = vpop.permute.xlu0 %2146
        %2148 = vrot.lane.b32.xlu0 %v425, 8
        %v2149 = vpop.permute.xlu0 %2148
        %2150 = vrot.lane.b32.xlu0 %v426, 8
        %v2151 = vpop.permute.xlu0 %2150
        %2152 = vrot.lane.b32.xlu0 %v427, 8
        %v2153 = vpop.permute.xlu0 %2152
        %2154 = vrot.lane.b32.xlu0 %v428, 8
        %v2155 = vpop.permute.xlu0 %2154
        %2156 = vrot.lane.b32.xlu0 %v429, 8
        %v2157 = vpop.permute.xlu0 %2156
        %2158 = vrot.lane.b32.xlu0 %v430, 8
        %v2159 = vpop.permute.xlu0 %2158
        %2160 = vrot.lane.b32.xlu0 %v431, 8
        %v2161 = vpop.permute.xlu0 %2160
        %2162 = vrot.lane.b32.xlu0 %v432, 8
        %v2163 = vpop.permute.xlu0 %2162
        %2164 = vrot.lane.b32.xlu0 %v433, 8
        %v2165 = vpop.permute.xlu0 %2164
        %2166 = vrot.lane.b32.xlu0 %v434, 8
        %v2167 = vpop.permute.xlu0 %2166
        %2168 = vrot.lane.b32.xlu0 %v435, 8
        %v2169 = vpop.permute.xlu0 %2168
        %2170 = vrot.lane.b32.xlu0 %v436, 8
        %v2171 = vpop.permute.xlu0 %2170
        %2172 = vrot.lane.b32.xlu0 %v437, 8
        %v2173 = vpop.permute.xlu0 %2172
        %2174 = vrot.lane.b32.xlu0 %v438, 8
        %v2175 = vpop.permute.xlu0 %2174
        %2176 = vrot.lane.b32.xlu0 %v439, 8
        %v2177 = vpop.permute.xlu0 %2176
        %2178 = vrot.lane.b32.xlu0 %v440, 8
        %v2179 = vpop.permute.xlu0 %2178
        %2180 = vrot.lane.b32.xlu0 %v441, 8
        %v2181 = vpop.permute.xlu0 %2180
        %2182 = vrot.lane.b32.xlu0 %v442, 8
        %v2183 = vpop.permute.xlu0 %2182
        %2184 = vrot.lane.b32.xlu0 %v443, 8
        %v2185 = vpop.permute.xlu0 %2184
        %2186 = vrot.lane.b32.xlu0 %v444, 8
        %v2187 = vpop.permute.xlu0 %2186
        %2188 = vrot.lane.b32.xlu0 %v445, 8
        %v2189 = vpop.permute.xlu0 %2188
        %2190 = vrot.lane.b32.xlu0 %v446, 8
        %v2191 = vpop.permute.xlu0 %2190
        %2192 = vrot.lane.b32.xlu0 %v447, 8
        %v2193 = vpop.permute.xlu0 %2192
        %2194 = vrot.lane.b32.xlu0 %v448, 8
        %v2195 = vpop.permute.xlu0 %2194
        %2196 = vrot.lane.b32.xlu0 %v449, 8
        %v2197 = vpop.permute.xlu0 %2196
        %2262 = vrot.lane.b32.xlu0 %v483, 16
        %v2263 = vpop.permute.xlu0 %2262
        %2264 = vrot.lane.b32.xlu0 %v484, 16
        %v2265 = vpop.permute.xlu0 %2264
        %2266 = vrot.lane.b32.xlu0 %v485, 16
        %v2267 = vpop.permute.xlu0 %2266
        %2268 = vrot.lane.b32.xlu0 %v486, 16
        %v2269 = vpop.permute.xlu0 %2268
        %2270 = vrot.lane.b32.xlu0 %v487, 16
        %v2271 = vpop.permute.xlu0 %2270
        %2272 = vrot.lane.b32.xlu0 %v488, 16
        %v2273 = vpop.permute.xlu0 %2272
        %2274 = vrot.lane.b32.xlu0 %v489, 16
        %v2275 = vpop.permute.xlu0 %2274
        %2276 = vrot.lane.b32.xlu0 %v490, 16
        %v2277 = vpop.permute.xlu0 %2276
        %2278 = vrot.lane.b32.xlu0 %v491, 16
        %v2279 = vpop.permute.xlu0 %2278
        %2280 = vrot.lane.b32.xlu0 %v492, 16
        %v2281 = vpop.permute.xlu0 %2280
        %2282 = vrot.lane.b32.xlu0 %v493, 16
        %v2283 = vpop.permute.xlu0 %2282
        %2284 = vrot.lane.b32.xlu0 %v494, 16
        %v2285 = vpop.permute.xlu0 %2284
        %2286 = vrot.lane.b32.xlu0 %v495, 16
        %v2287 = vpop.permute.xlu0 %2286
        %2288 = vrot.lane.b32.xlu0 %v496, 16
        %v2289 = vpop.permute.xlu0 %2288
        %2290 = vrot.lane.b32.xlu0 %v497, 16
        %v2291 = vpop.permute.xlu0 %2290
        %2292 = vrot.lane.b32.xlu0 %v498, 16
        %v2293 = vpop.permute.xlu0 %2292
        %2294 = vrot.lane.b32.xlu0 %v499, 16
        %v2295 = vpop.permute.xlu0 %2294
        %2296 = vrot.lane.b32.xlu0 %v500, 16
        %v2297 = vpop.permute.xlu0 %2296
        %2298 = vrot.lane.b32.xlu0 %v501, 16
        %v2299 = vpop.permute.xlu0 %2298
        %2300 = vrot.lane.b32.xlu0 %v502, 16
        %v2301 = vpop.permute.xlu0 %2300
        %2302 = vrot.lane.b32.xlu0 %v503, 16
        %v2303 = vpop.permute.xlu0 %2302
        %2304 = vrot.lane.b32.xlu0 %v504, 16
        %v2305 = vpop.permute.xlu0 %2304
        %2306 = vrot.lane.b32.xlu0 %v505, 16
        %v2307 = vpop.permute.xlu0 %2306
        %2308 = vrot.lane.b32.xlu0 %v506, 16
        %v2309 = vpop.permute.xlu0 %2308
        %2310 = vrot.lane.b32.xlu0 %v507, 16
        %v2311 = vpop.permute.xlu0 %2310
        %2312 = vrot.lane.b32.xlu0 %v508, 16
        %v2313 = vpop.permute.xlu0 %2312
        %2314 = vrot.lane.b32.xlu0 %v509, 16
        %v2315 = vpop.permute.xlu0 %2314
        %2316 = vrot.lane.b32.xlu0 %v510, 16
        %v2317 = vpop.permute.xlu0 %2316
        %2318 = vrot.lane.b32.xlu0 %v511, 16
        %v2319 = vpop.permute.xlu0 %2318
        %2320 = vrot.lane.b32.xlu0 %v512, 16
        %v2321 = vpop.permute.xlu0 %2320
        %2322 = vrot.lane.b32.xlu0 %v513, 16
        %v2323 = vpop.permute.xlu0 %2322
        %2324 = vrot.lane.b32.xlu0 %v514, 16
        %v2325 = vpop.permute.xlu0 %2324
        %2390 = vrot.lane.b32.xlu0 %v515, 24
        %v2391 = vpop.permute.xlu0 %2390
        %2392 = vrot.lane.b32.xlu0 %v516, 24
        %v2393 = vpop.permute.xlu0 %2392
        %2394 = vrot.lane.b32.xlu0 %v517, 24
        %v2395 = vpop.permute.xlu0 %2394
        %2396 = vrot.lane.b32.xlu0 %v518, 24
        %v2397 = vpop.permute.xlu0 %2396
        %2398 = vrot.lane.b32.xlu0 %v519, 24
        %v2399 = vpop.permute.xlu0 %2398
        %2400 = vrot.lane.b32.xlu0 %v520, 24
        %v2401 = vpop.permute.xlu0 %2400
        %2402 = vrot.lane.b32.xlu0 %v521, 24
        %v2403 = vpop.permute.xlu0 %2402
        %2404 = vrot.lane.b32.xlu0 %v522, 24
        %v2405 = vpop.permute.xlu0 %2404
        %2406 = vrot.lane.b32.xlu0 %v523, 24
        %v2407 = vpop.permute.xlu0 %2406
        %2408 = vrot.lane.b32.xlu0 %v524, 24
        %v2409 = vpop.permute.xlu0 %2408
        %2410 = vrot.lane.b32.xlu0 %v525, 24
        %v2411 = vpop.permute.xlu0 %2410
        %2412 = vrot.lane.b32.xlu0 %v526, 24
        %v2413 = vpop.permute.xlu0 %2412
        %2414 = vrot.lane.b32.xlu0 %v527, 24
        %v2415 = vpop.permute.xlu0 %2414
        %2416 = vrot.lane.b32.xlu0 %v528, 24
        %v2417 = vpop.permute.xlu0 %2416
        %2418 = vrot.lane.b32.xlu0 %v529, 24
        %v2419 = vpop.permute.xlu0 %2418
        %2420 = vrot.lane.b32.xlu0 %v530, 24
        %v2421 = vpop.permute.xlu0 %2420
        %2422 = vrot.lane.b32.xlu0 %v531, 24
        %v2423 = vpop.permute.xlu0 %2422
        %2424 = vrot.lane.b32.xlu0 %v532, 24
        %v2425 = vpop.permute.xlu0 %2424
        %2426 = vrot.lane.b32.xlu0 %v533, 24
        %v2427 = vpop.permute.xlu0 %2426
        %2428 = vrot.lane.b32.xlu0 %v534, 24
        %v2429 = vpop.permute.xlu0 %2428
        %2430 = vrot.lane.b32.xlu0 %v535, 24
        %v2431 = vpop.permute.xlu0 %2430
        %2432 = vrot.lane.b32.xlu0 %v536, 24
        %v2433 = vpop.permute.xlu0 %2432
        %2434 = vrot.lane.b32.xlu0 %v537, 24
        %v2435 = vpop.permute.xlu0 %2434
        %2436 = vrot.lane.b32.xlu0 %v538, 24
        %v2437 = vpop.permute.xlu0 %2436
        %2438 = vrot.lane.b32.xlu0 %v539, 24
        %v2439 = vpop.permute.xlu0 %2438
        %2440 = vrot.lane.b32.xlu0 %v540, 24
        %v2441 = vpop.permute.xlu0 %2440
        %2442 = vrot.lane.b32.xlu0 %v541, 24
        %v2443 = vpop.permute.xlu0 %2442
        %2444 = vrot.lane.b32.xlu0 %v542, 24
        %v2445 = vpop.permute.xlu0 %2444
        %2446 = vrot.lane.b32.xlu0 %v543, 24
        %v2447 = vpop.permute.xlu0 %2446
        %2448 = vrot.lane.b32.xlu0 %v544, 24
        %v2449 = vpop.permute.xlu0 %2448
        %2450 = vrot.lane.b32.xlu0 %v545, 24
        %v2451 = vpop.permute.xlu0 %2450
        %2452 = vrot.lane.b32.xlu0 %v546, 24
        %v2453 = vpop.permute.xlu0 %2452
        %v2486 = vsel %vm169, %v386, %v2135
        %v2487 = vsel %vm169, %v387, %v2137
        %v2488 = vsel %vm169, %v388, %v2139
        %v2489 = vsel %vm169, %v389, %v2141
        %v2490 = vsel %vm169, %v390, %v2143
        %v2491 = vsel %vm169, %v391, %v2145
        %v2492 = vsel %vm169, %v392, %v2147
        %v2493 = vsel %vm169, %v393, %v2149
        %v2494 = vsel %vm169, %v394, %v2151
        %v2495 = vsel %vm169, %v395, %v2153
        %v2496 = vsel %vm169, %v396, %v2155
        %v2497 = vsel %vm169, %v397, %v2157
        %v2498 = vsel %vm169, %v398, %v2159
        %v2499 = vsel %vm169, %v399, %v2161
        %v2500 = vsel %vm169, %v400, %v2163
        %v2501 = vsel %vm169, %v401, %v2165
        %v2502 = vsel %vm169, %v402, %v2167
        %v2503 = vsel %vm169, %v403, %v2169
        %v2504 = vsel %vm169, %v404, %v2171
        %v2505 = vsel %vm169, %v405, %v2173
        %v2506 = vsel %vm169, %v406, %v2175
        %v2507 = vsel %vm169, %v407, %v2177
        %v2508 = vsel %vm169, %v408, %v2179
        %v2509 = vsel %vm169, %v409, %v2181
        %v2510 = vsel %vm169, %v410, %v2183
        %v2511 = vsel %vm169, %v411, %v2185
        %v2512 = vsel %vm169, %v412, %v2187
        %v2513 = vsel %vm169, %v413, %v2189
        %v2514 = vsel %vm169, %v414, %v2191
        %v2515 = vsel %vm169, %v415, %v2193
        %v2516 = vsel %vm169, %v416, %v2195
        %v2517 = vsel %vm169, %v417, %v2197
        %v2518 = vsel %vm996, %v2486, %v2263
        %v2519 = vsel %vm996, %v2487, %v2265
        %v2520 = vsel %vm996, %v2488, %v2267
        %v2521 = vsel %vm996, %v2489, %v2269
        %v2522 = vsel %vm996, %v2490, %v2271
        %v2523 = vsel %vm996, %v2491, %v2273
        %v2524 = vsel %vm996, %v2492, %v2275
        %v2525 = vsel %vm996, %v2493, %v2277
        %v2526 = vsel %vm996, %v2494, %v2279
        %v2527 = vsel %vm996, %v2495, %v2281
        %v2528 = vsel %vm996, %v2496, %v2283
        %v2529 = vsel %vm996, %v2497, %v2285
        %v2530 = vsel %vm996, %v2498, %v2287
        %v2531 = vsel %vm996, %v2499, %v2289
        %v2532 = vsel %vm996, %v2500, %v2291
        %v2533 = vsel %vm996, %v2501, %v2293
        %v2534 = vsel %vm996, %v2502, %v2295
        %v2535 = vsel %vm996, %v2503, %v2297
        %v2536 = vsel %vm996, %v2504, %v2299
        %v2537 = vsel %vm996, %v2505, %v2301
        %v2538 = vsel %vm996, %v2506, %v2303
        %v2539 = vsel %vm996, %v2507, %v2305
        %v2540 = vsel %vm996, %v2508, %v2307
        %v2541 = vsel %vm996, %v2509, %v2309
        %v2542 = vsel %vm996, %v2510, %v2311
        %v2543 = vsel %vm996, %v2511, %v2313
        %v2544 = vsel %vm996, %v2512, %v2315
        %v2545 = vsel %vm996, %v2513, %v2317
        %v2546 = vsel %vm996, %v2514, %v2319
        %v2547 = vsel %vm996, %v2515, %v2321
        %v2548 = vsel %vm996, %v2516, %v2323
        %v2549 = vsel %vm996, %v2517, %v2325
        %v2550 = vsel %vm1029, %v2518, %v2391
        %v2551 = vsel %vm1029, %v2519, %v2393
        %v2552 = vsel %vm1029, %v2520, %v2395
        %v2553 = vsel %vm1029, %v2521, %v2397
        %v2554 = vsel %vm1029, %v2522, %v2399
        %v2555 = vsel %vm1029, %v2523, %v2401
        %v2556 = vsel %vm1029, %v2524, %v2403
        %v2557 = vsel %vm1029, %v2525, %v2405
        %v2558 = vsel %vm1029, %v2526, %v2407
        %v2559 = vsel %vm1029, %v2527, %v2409
        %v2560 = vsel %vm1029, %v2528, %v2411
        %v2561 = vsel %vm1029, %v2529, %v2413
        %v2562 = vsel %vm1029, %v2530, %v2415
        %v2563 = vsel %vm1029, %v2531, %v2417
        %v2564 = vsel %vm1029, %v2532, %v2419
        %v2565 = vsel %vm1029, %v2533, %v2421
        %v2566 = vsel %vm1029, %v2534, %v2423
        %v2567 = vsel %vm1029, %v2535, %v2425
        %v2568 = vsel %vm1029, %v2536, %v2427
        %v2569 = vsel %vm1029, %v2537, %v2429
        %v2570 = vsel %vm1029, %v2538, %v2431
        %v2571 = vsel %vm1029, %v2539, %v2433
        %v2572 = vsel %vm1029, %v2540, %v2435
        %v2573 = vsel %vm1029, %v2541, %v2437
        %v2574 = vsel %vm1029, %v2542, %v2439
        %v2575 = vsel %vm1029, %v2543, %v2441
        %v2576 = vsel %vm1029, %v2544, %v2443
        %v2577 = vsel %vm1029, %v2545, %v2445
        %v2578 = vsel %vm1029, %v2546, %v2447
        %v2579 = vsel %vm1029, %v2547, %v2449
        %v2580 = vsel %vm1029, %v2548, %v2451
        %v2581 = vsel %vm1029, %v2549, %v2453
        %s2582 = scalar_lea.vmem %s1, 64
        %v2583 = vld [vmem:[%s2582] sm:$0xff]
        %v2584 = vld [vmem:[%s2582 + $0x8] sm:$0xff]
        %v2585 = vld [vmem:[%s2582 + $0x10] sm:$0xff]
        %v2586 = vld [vmem:[%s2582 + $0x18] sm:$0xff]
        %v2588 = vsel %vm1069, %v2550, 0
        %v2591 = vsel %vm1069, %v2551, 0
        %v2594 = vsel %vm1069, %v2552, 0
        %v2597 = vsel %vm1069, %v2553, 0
        %v2600 = vsel %vm1069, %v2554, 0
        %v2603 = vsel %vm1069, %v2555, 0
        %v2606 = vsel %vm1069, %v2556, 0
        %v2609 = vsel %vm1069, %v2557, 0
        %v2612 = vsel %vm1069, %v2558, 0
        %v2615 = vsel %vm1069, %v2559, 0
        %v2618 = vsel %vm1069, %v2560, 0
        %v2621 = vsel %vm1069, %v2561, 0
        %v2624 = vsel %vm1069, %v2562, 0
        %v2627 = vsel %vm1069, %v2563, 0
        %v2630 = vsel %vm1069, %v2564, 0
        %v2633 = vsel %vm1069, %v2565, 0
        %v2636 = vsel %vm1069, %v2566, 0
        %v2639 = vsel %vm1069, %v2567, 0
        %v2642 = vsel %vm1069, %v2568, 0
        %v2645 = vsel %vm1069, %v2569, 0
        %v2648 = vsel %vm1069, %v2570, 0
        %v2651 = vsel %vm1069, %v2571, 0
        %v2654 = vsel %vm1069, %v2572, 0
        %v2657 = vsel %vm1069, %v2573, 0
        %v2660 = vsel %vm1069, %v2574, 0
        %v2663 = vsel %vm1069, %v2575, 0
        %v2666 = vsel %vm1069, %v2576, 0
        %v2669 = vsel %vm1069, %v2577, 0
        %v2672 = vsel %vm1069, %v2578, 0
        %v2675 = vsel %vm1069, %v2579, 0
        %v2678 = vsel %vm1069, %v2580, 0
        %v2681 = vsel %vm1069, %v2581, 0
        %2683 = vmatpush.msra.mxu0 0.0
        %2684 = vmatpush.msra.mxu0 0.0
        %2685 = vmatpush.msra.mxu0 0.0
        %2686 = vmatpush.msra.mxu0 0.0
        %2687 = vmatpush.msra.mxu0 0.0
        %2688 = vmatpush.msra.mxu0 0.0
        %2689 = vmatpush.msra.mxu0 0.0
        %2690 = vmatpush.msra.mxu0 0.0
        %2691 = vmatpush.msra.mxu0 0.0
        %2692 = vmatpush.msra.mxu0 0.0
        %2693 = vmatpush.msra.mxu0 0.0
        %2694 = vmatpush.msra.mxu0 0.0
        %2695 = vmatpush.msra.mxu0 %v2586
        %2696 = vmatpush.msra.mxu0 %v2585
        %2697 = vmatpush.msra.mxu0 %v2584
        %2698 = vmatpush.msra.mxu0 %v2583
        %2699 = vmatmul.f32.gmra.mxu0 %v2588
        %v2700 = vpop.f32.mrf.mxu0
        %v2701 = vadd.f32 %v1067, %v2700
        %2702 = vmatmul.f32.gmra.mxu0 %v2591
        %v2703 = vpop.f32.mrf.mxu0
        %v2704 = vadd.f32 %v1067, %v2703
        %2705 = vmatmul.f32.gmra.mxu0 %v2594
        %v2706 = vpop.f32.mrf.mxu0
        %v2707 = vadd.f32 %v1067, %v2706
        %2708 = vmatmul.f32.gmra.mxu0 %v2597
        %v2709 = vpop.f32.mrf.mxu0
        %v2710 = vadd.f32 %v1067, %v2709
        %2711 = vmatmul.f32.gmra.mxu0 %v2600
        %v2712 = vpop.f32.mrf.mxu0
        %v2713 = vadd.f32 %v1067, %v2712
        %2714 = vmatmul.f32.gmra.mxu0 %v2603
        %v2715 = vpop.f32.mrf.mxu0
        %v2716 = vadd.f32 %v1067, %v2715
        %2717 = vmatmul.f32.gmra.mxu0 %v2606
        %v2718 = vpop.f32.mrf.mxu0
        %v2719 = vadd.f32 %v1067, %v2718
        %2720 = vmatmul.f32.gmra.mxu0 %v2609
        %v2721 = vpop.f32.mrf.mxu0
        %v2722 = vadd.f32 %v1067, %v2721
        %2723 = vmatmul.f32.gmra.mxu0 %v2612
        %v2724 = vpop.f32.mrf.mxu0
        %v2725 = vadd.f32 %v1067, %v2724
        %2726 = vmatmul.f32.gmra.mxu0 %v2615
        %v2727 = vpop.f32.mrf.mxu0
        %v2728 = vadd.f32 %v1067, %v2727
        %2729 = vmatmul.f32.gmra.mxu0 %v2618
        %v2730 = vpop.f32.mrf.mxu0
        %v2731 = vadd.f32 %v1067, %v2730
        %2732 = vmatmul.f32.gmra.mxu0 %v2621
        %v2733 = vpop.f32.mrf.mxu0
        %v2734 = vadd.f32 %v1067, %v2733
        %2735 = vmatmul.f32.gmra.mxu0 %v2624
        %v2736 = vpop.f32.mrf.mxu0
        %v2737 = vadd.f32 %v1067, %v2736
        %2738 = vmatmul.f32.gmra.mxu0 %v2627
        %v2739 = vpop.f32.mrf.mxu0
        %v2740 = vadd.f32 %v1067, %v2739
        %2741 = vmatmul.f32.gmra.mxu0 %v2630
        %v2742 = vpop.f32.mrf.mxu0
        %v2743 = vadd.f32 %v1067, %v2742
        %2744 = vmatmul.f32.gmra.mxu0 %v2633
        %v2745 = vpop.f32.mrf.mxu0
        %v2746 = vadd.f32 %v1067, %v2745
        %2747 = vmatmul.f32.gmra.mxu0 %v2636
        %v2748 = vpop.f32.mrf.mxu0
        %v2749 = vadd.f32 %v1067, %v2748
        %2750 = vmatmul.f32.gmra.mxu0 %v2639
        %v2751 = vpop.f32.mrf.mxu0
        %v2752 = vadd.f32 %v1067, %v2751
        %2753 = vmatmul.f32.gmra.mxu0 %v2642
        %v2754 = vpop.f32.mrf.mxu0
        %v2755 = vadd.f32 %v1067, %v2754
        %2756 = vmatmul.f32.gmra.mxu0 %v2645
        %v2757 = vpop.f32.mrf.mxu0
        %v2758 = vadd.f32 %v1067, %v2757
        %2759 = vmatmul.f32.gmra.mxu0 %v2648
        %v2760 = vpop.f32.mrf.mxu0
        %v2761 = vadd.f32 %v1067, %v2760
        %2762 = vmatmul.f32.gmra.mxu0 %v2651
        %v2763 = vpop.f32.mrf.mxu0
        %v2764 = vadd.f32 %v1067, %v2763
        %2765 = vmatmul.f32.gmra.mxu0 %v2654
        %v2766 = vpop.f32.mrf.mxu0
        %v2767 = vadd.f32 %v1067, %v2766
        %2768 = vmatmul.f32.gmra.mxu0 %v2657
        %v2769 = vpop.f32.mrf.mxu0
        %v2770 = vadd.f32 %v1067, %v2769
        %2771 = vmatmul.f32.gmra.mxu0 %v2660
        %v2772 = vpop.f32.mrf.mxu0
        %v2773 = vadd.f32 %v1067, %v2772
        %2774 = vmatmul.f32.gmra.mxu0 %v2663
        %v2775 = vpop.f32.mrf.mxu0
        %v2776 = vadd.f32 %v1067, %v2775
        %2777 = vmatmul.f32.gmra.mxu0 %v2666
        %v2778 = vpop.f32.mrf.mxu0
        %v2779 = vadd.f32 %v1067, %v2778
        %2780 = vmatmul.f32.gmra.mxu0 %v2669
        %v2781 = vpop.f32.mrf.mxu0
        %v2782 = vadd.f32 %v1067, %v2781
        %2783 = vmatmul.f32.gmra.mxu0 %v2672
        %v2784 = vpop.f32.mrf.mxu0
        %v2785 = vadd.f32 %v1067, %v2784
        %2786 = vmatmul.f32.gmra.mxu0 %v2675
        %v2787 = vpop.f32.mrf.mxu0
        %v2788 = vadd.f32 %v1067, %v2787
        %2789 = vmatmul.f32.gmra.mxu0 %v2678
        %v2790 = vpop.f32.mrf.mxu0
        %v2791 = vadd.f32 %v1067, %v2790
        %2792 = vmatmul.f32.gmra.mxu0 %v2681
        %v2793 = vpop.f32.mrf.mxu0
        %v2794 = vadd.f32 %v1067, %v2793
        %2795 = vdwg.mxu0
        %s2796 = scalar_lea.vmem %s163, 16 [#allocation3]
        %2797 = vst.msk [vmem:[%s2796] sm:$0xff] %vm169, %v2701
        %2798 = vst.msk [vmem:[%s2796 + $0x8] sm:$0xff] %vm169, %v2704
        %2799 = vst.msk [vmem:[%s2796 + $0x20] sm:$0xff] %vm169, %v2707
        %2800 = vst.msk [vmem:[%s2796 + $0x28] sm:$0xff] %vm169, %v2710
        %2801 = vst.msk [vmem:[%s2796 + $0x40] sm:$0xff] %vm169, %v2713
        %2802 = vst.msk [vmem:[%s2796 + $0x48] sm:$0xff] %vm169, %v2716
        %2803 = vst.msk [vmem:[%s2796 + $0x60] sm:$0xff] %vm169, %v2719
        %2804 = vst.msk [vmem:[%s2796 + $0x68] sm:$0xff] %vm169, %v2722
        %2805 = vst.msk [vmem:[%s2796 + $0x80] sm:$0xff] %vm169, %v2725
        %2806 = vst.msk [vmem:[%s2796 + $0x88] sm:$0xff] %vm169, %v2728
        %2807 = vst.msk [vmem:[%s2796 + $0xa0] sm:$0xff] %vm169, %v2731
        %2808 = vst.msk [vmem:[%s2796 + $0xa8] sm:$0xff] %vm169, %v2734
        %2809 = vst.msk [vmem:[%s2796 + $0xc0] sm:$0xff] %vm169, %v2737
        %2810 = vst.msk [vmem:[%s2796 + $0xc8] sm:$0xff] %vm169, %v2740
        %2811 = vst.msk [vmem:[%s2796 + $0xe0] sm:$0xff] %vm169, %v2743
        %2812 = vst.msk [vmem:[%s2796 + $0xe8] sm:$0xff] %vm169, %v2746
        %2813 = vst.msk [vmem:[%s2796 + $0x100] sm:$0xff] %vm169, %v2749
        %2814 = vst.msk [vmem:[%s2796 + $0x108] sm:$0xff] %vm169, %v2752
        %2815 = vst.msk [vmem:[%s2796 + $0x120] sm:$0xff] %vm169, %v2755
        %2816 = vst.msk [vmem:[%s2796 + $0x128] sm:$0xff] %vm169, %v2758
        %2817 = vst.msk [vmem:[%s2796 + $0x140] sm:$0xff] %vm169, %v2761
        %2818 = vst.msk [vmem:[%s2796 + $0x148] sm:$0xff] %vm169, %v2764
        %2819 = vst.msk [vmem:[%s2796 + $0x160] sm:$0xff] %vm169, %v2767
        %2820 = vst.msk [vmem:[%s2796 + $0x168] sm:$0xff] %vm169, %v2770
        %2821 = vst.msk [vmem:[%s2796 + $0x180] sm:$0xff] %vm169, %v2773
        %2822 = vst.msk [vmem:[%s2796 + $0x188] sm:$0xff] %vm169, %v2776
        %2823 = vst.msk [vmem:[%s2796 + $0x1a0] sm:$0xff] %vm169, %v2779
        %2824 = vst.msk [vmem:[%s2796 + $0x1a8] sm:$0xff] %vm169, %v2782
        %2825 = vst.msk [vmem:[%s2796 + $0x1c0] sm:$0xff] %vm169, %v2785
        %2826 = vst.msk [vmem:[%s2796 + $0x1c8] sm:$0xff] %vm169, %v2788
        %2827 = vst.msk [vmem:[%s2796 + $0x1e0] sm:$0xff] %vm169, %v2791
        %2828 = vst.msk [vmem:[%s2796 + $0x1e8] sm:$0xff] %vm169, %v2794
        %2829 = vrot.lane.b32.xlu0 %v450, 8
        %v2830 = vpop.permute.xlu0 %2829
        %2831 = vrot.lane.b32.xlu0 %v451, 8
        %v2832 = vpop.permute.xlu0 %2831
        %2833 = vrot.lane.b32.xlu0 %v452, 8
        %v2834 = vpop.permute.xlu0 %2833
        %2835 = vrot.lane.b32.xlu0 %v453, 8
        %v2836 = vpop.permute.xlu0 %2835
        %2837 = vrot.lane.b32.xlu0 %v454, 8
        %v2838 = vpop.permute.xlu0 %2837
        %2839 = vrot.lane.b32.xlu0 %v455, 8
        %v2840 = vpop.permute.xlu0 %2839
        %2841 = vrot.lane.b32.xlu0 %v456, 8
        %v2842 = vpop.permute.xlu0 %2841
        %2843 = vrot.lane.b32.xlu0 %v457, 8
        %v2844 = vpop.permute.xlu0 %2843
        %2845 = vrot.lane.b32.xlu0 %v458, 8
        %v2846 = vpop.permute.xlu0 %2845
        %2847 = vrot.lane.b32.xlu0 %v459, 8
        %v2848 = vpop.permute.xlu0 %2847
        %2849 = vrot.lane.b32.xlu0 %v460, 8
        %v2850 = vpop.permute.xlu0 %2849
        %2851 = vrot.lane.b32.xlu0 %v461, 8
        %v2852 = vpop.permute.xlu0 %2851
        %2853 = vrot.lane.b32.xlu0 %v462, 8
        %v2854 = vpop.permute.xlu0 %2853
        %2855 = vrot.lane.b32.xlu0 %v463, 8
        %v2856 = vpop.permute.xlu0 %2855
        %2857 = vrot.lane.b32.xlu0 %v464, 8
        %v2858 = vpop.permute.xlu0 %2857
        %2859 = vrot.lane.b32.xlu0 %v465, 8
        %v2860 = vpop.permute.xlu0 %2859
        %2861 = vrot.lane.b32.xlu0 %v466, 8
        %v2862 = vpop.permute.xlu0 %2861
        %2863 = vrot.lane.b32.xlu0 %v467, 8
        %v2864 = vpop.permute.xlu0 %2863
        %2865 = vrot.lane.b32.xlu0 %v468, 8
        %v2866 = vpop.permute.xlu0 %2865
        %2867 = vrot.lane.b32.xlu0 %v469, 8
        %v2868 = vpop.permute.xlu0 %2867
        %2869 = vrot.lane.b32.xlu0 %v470, 8
        %v2870 = vpop.permute.xlu0 %2869
        %2871 = vrot.lane.b32.xlu0 %v471, 8
        %v2872 = vpop.permute.xlu0 %2871
        %2873 = vrot.lane.b32.xlu0 %v472, 8
        %v2874 = vpop.permute.xlu0 %2873
        %2875 = vrot.lane.b32.xlu0 %v473, 8
        %v2876 = vpop.permute.xlu0 %2875
        %2877 = vrot.lane.b32.xlu0 %v474, 8
        %v2878 = vpop.permute.xlu0 %2877
        %2879 = vrot.lane.b32.xlu0 %v475, 8
        %v2880 = vpop.permute.xlu0 %2879
        %2881 = vrot.lane.b32.xlu0 %v476, 8
        %v2882 = vpop.permute.xlu0 %2881
        %2883 = vrot.lane.b32.xlu0 %v477, 8
        %v2884 = vpop.permute.xlu0 %2883
        %2885 = vrot.lane.b32.xlu0 %v478, 8
        %v2886 = vpop.permute.xlu0 %2885
        %2887 = vrot.lane.b32.xlu0 %v479, 8
        %v2888 = vpop.permute.xlu0 %2887
        %2889 = vrot.lane.b32.xlu0 %v480, 8
        %v2890 = vpop.permute.xlu0 %2889
        %2891 = vrot.lane.b32.xlu0 %v481, 8
        %v2892 = vpop.permute.xlu0 %2891
        %2925 = vrot.lane.b32.xlu0 %v515, 16
        %v2926 = vpop.permute.xlu0 %2925
        %2927 = vrot.lane.b32.xlu0 %v516, 16
        %v2928 = vpop.permute.xlu0 %2927
        %2929 = vrot.lane.b32.xlu0 %v517, 16
        %v2930 = vpop.permute.xlu0 %2929
        %2931 = vrot.lane.b32.xlu0 %v518, 16
        %v2932 = vpop.permute.xlu0 %2931
        %2933 = vrot.lane.b32.xlu0 %v519, 16
        %v2934 = vpop.permute.xlu0 %2933
        %2935 = vrot.lane.b32.xlu0 %v520, 16
        %v2936 = vpop.permute.xlu0 %2935
        %2937 = vrot.lane.b32.xlu0 %v521, 16
        %v2938 = vpop.permute.xlu0 %2937
        %2939 = vrot.lane.b32.xlu0 %v522, 16
        %v2940 = vpop.permute.xlu0 %2939
        %2941 = vrot.lane.b32.xlu0 %v523, 16
        %v2942 = vpop.permute.xlu0 %2941
        %2943 = vrot.lane.b32.xlu0 %v524, 16
        %v2944 = vpop.permute.xlu0 %2943
        %2945 = vrot.lane.b32.xlu0 %v525, 16
        %v2946 = vpop.permute.xlu0 %2945
        %2947 = vrot.lane.b32.xlu0 %v526, 16
        %v2948 = vpop.permute.xlu0 %2947
        %2949 = vrot.lane.b32.xlu0 %v527, 16
        %v2950 = vpop.permute.xlu0 %2949
        %2951 = vrot.lane.b32.xlu0 %v528, 16
        %v2952 = vpop.permute.xlu0 %2951
        %2953 = vrot.lane.b32.xlu0 %v529, 16
        %v2954 = vpop.permute.xlu0 %2953
        %2955 = vrot.lane.b32.xlu0 %v530, 16
        %v2956 = vpop.permute.xlu0 %2955
        %2957 = vrot.lane.b32.xlu0 %v531, 16
        %v2958 = vpop.permute.xlu0 %2957
        %2959 = vrot.lane.b32.xlu0 %v532, 16
        %v2960 = vpop.permute.xlu0 %2959
        %2961 = vrot.lane.b32.xlu0 %v533, 16
        %v2962 = vpop.permute.xlu0 %2961
        %2963 = vrot.lane.b32.xlu0 %v534, 16
        %v2964 = vpop.permute.xlu0 %2963
        %2965 = vrot.lane.b32.xlu0 %v535, 16
        %v2966 = vpop.permute.xlu0 %2965
        %2967 = vrot.lane.b32.xlu0 %v536, 16
        %v2968 = vpop.permute.xlu0 %2967
        %2969 = vrot.lane.b32.xlu0 %v537, 16
        %v2970 = vpop.permute.xlu0 %2969
        %2971 = vrot.lane.b32.xlu0 %v538, 16
        %v2972 = vpop.permute.xlu0 %2971
        %2973 = vrot.lane.b32.xlu0 %v539, 16
        %v2974 = vpop.permute.xlu0 %2973
        %2975 = vrot.lane.b32.xlu0 %v540, 16
        %v2976 = vpop.permute.xlu0 %2975
        %2977 = vrot.lane.b32.xlu0 %v541, 16
        %v2978 = vpop.permute.xlu0 %2977
        %2979 = vrot.lane.b32.xlu0 %v542, 16
        %v2980 = vpop.permute.xlu0 %2979
        %2981 = vrot.lane.b32.xlu0 %v543, 16
        %v2982 = vpop.permute.xlu0 %2981
        %2983 = vrot.lane.b32.xlu0 %v544, 16
        %v2984 = vpop.permute.xlu0 %2983
        %2985 = vrot.lane.b32.xlu0 %v545, 16
        %v2986 = vpop.permute.xlu0 %2985
        %2987 = vrot.lane.b32.xlu0 %v546, 16
        %v2988 = vpop.permute.xlu0 %2987
        %3053 = vrot.lane.b32.xlu0 %v547, 24
        %v3054 = vpop.permute.xlu0 %3053
        %3055 = vrot.lane.b32.xlu0 %v548, 24
        %v3056 = vpop.permute.xlu0 %3055
        %3057 = vrot.lane.b32.xlu0 %v549, 24
        %v3058 = vpop.permute.xlu0 %3057
        %3059 = vrot.lane.b32.xlu0 %v550, 24
        %v3060 = vpop.permute.xlu0 %3059
        %3061 = vrot.lane.b32.xlu0 %v551, 24
        %v3062 = vpop.permute.xlu0 %3061
        %3063 = vrot.lane.b32.xlu0 %v552, 24
        %v3064 = vpop.permute.xlu0 %3063
        %3065 = vrot.lane.b32.xlu0 %v553, 24
        %v3066 = vpop.permute.xlu0 %3065
        %3067 = vrot.lane.b32.xlu0 %v554, 24
        %v3068 = vpop.permute.xlu0 %3067
        %3069 = vrot.lane.b32.xlu0 %v555, 24
        %v3070 = vpop.permute.xlu0 %3069
        %3071 = vrot.lane.b32.xlu0 %v556, 24
        %v3072 = vpop.permute.xlu0 %3071
        %3073 = vrot.lane.b32.xlu0 %v557, 24
        %v3074 = vpop.permute.xlu0 %3073
        %3075 = vrot.lane.b32.xlu0 %v558, 24
        %v3076 = vpop.permute.xlu0 %3075
        %3077 = vrot.lane.b32.xlu0 %v559, 24
        %v3078 = vpop.permute.xlu0 %3077
        %3079 = vrot.lane.b32.xlu0 %v560, 24
        %v3080 = vpop.permute.xlu0 %3079
        %3081 = vrot.lane.b32.xlu0 %v561, 24
        %v3082 = vpop.permute.xlu0 %3081
        %3083 = vrot.lane.b32.xlu0 %v562, 24
        %v3084 = vpop.permute.xlu0 %3083
        %3085 = vrot.lane.b32.xlu0 %v563, 24
        %v3086 = vpop.permute.xlu0 %3085
        %3087 = vrot.lane.b32.xlu0 %v564, 24
        %v3088 = vpop.permute.xlu0 %3087
        %3089 = vrot.lane.b32.xlu0 %v565, 24
        %v3090 = vpop.permute.xlu0 %3089
        %3091 = vrot.lane.b32.xlu0 %v566, 24
        %v3092 = vpop.permute.xlu0 %3091
        %3093 = vrot.lane.b32.xlu0 %v567, 24
        %v3094 = vpop.permute.xlu0 %3093
        %3095 = vrot.lane.b32.xlu0 %v568, 24
        %v3096 = vpop.permute.xlu0 %3095
        %3097 = vrot.lane.b32.xlu0 %v569, 24
        %v3098 = vpop.permute.xlu0 %3097
        %3099 = vrot.lane.b32.xlu0 %v570, 24
        %v3100 = vpop.permute.xlu0 %3099
        %3101 = vrot.lane.b32.xlu0 %v571, 24
        %v3102 = vpop.permute.xlu0 %3101
        %3103 = vrot.lane.b32.xlu0 %v572, 24
        %v3104 = vpop.permute.xlu0 %3103
        %3105 = vrot.lane.b32.xlu0 %v573, 24
        %v3106 = vpop.permute.xlu0 %3105
        %3107 = vrot.lane.b32.xlu0 %v574, 24
        %v3108 = vpop.permute.xlu0 %3107
        %3109 = vrot.lane.b32.xlu0 %v575, 24
        %v3110 = vpop.permute.xlu0 %3109
        %3111 = vrot.lane.b32.xlu0 %v576, 24
        %v3112 = vpop.permute.xlu0 %3111
        %3113 = vrot.lane.b32.xlu0 %v577, 24
        %v3114 = vpop.permute.xlu0 %3113
        %3115 = vrot.lane.b32.xlu0 %v578, 24
        %v3116 = vpop.permute.xlu0 %3115
        %v3149 = vsel %vm169, %v418, %v2830
        %v3150 = vsel %vm169, %v419, %v2832
        %v3151 = vsel %vm169, %v420, %v2834
        %v3152 = vsel %vm169, %v421, %v2836
        %v3153 = vsel %vm169, %v422, %v2838
        %v3154 = vsel %vm169, %v423, %v2840
        %v3155 = vsel %vm169, %v424, %v2842
        %v3156 = vsel %vm169, %v425, %v2844
        %v3157 = vsel %vm169, %v426, %v2846
        %v3158 = vsel %vm169, %v427, %v2848
        %v3159 = vsel %vm169, %v428, %v2850
        %v3160 = vsel %vm169, %v429, %v2852
        %v3161 = vsel %vm169, %v430, %v2854
        %v3162 = vsel %vm169, %v431, %v2856
        %v3163 = vsel %vm169, %v432, %v2858
        %v3164 = vsel %vm169, %v433, %v2860
        %v3165 = vsel %vm169, %v434, %v2862
        %v3166 = vsel %vm169, %v435, %v2864
        %v3167 = vsel %vm169, %v436, %v2866
        %v3168 = vsel %vm169, %v437, %v2868
        %v3169 = vsel %vm169, %v438, %v2870
        %v3170 = vsel %vm169, %v439, %v2872
        %v3171 = vsel %vm169, %v440, %v2874
        %v3172 = vsel %vm169, %v441, %v2876
        %v3173 = vsel %vm169, %v442, %v2878
        %v3174 = vsel %vm169, %v443, %v2880
        %v3175 = vsel %vm169, %v444, %v2882
        %v3176 = vsel %vm169, %v445, %v2884
        %v3177 = vsel %vm169, %v446, %v2886
        %v3178 = vsel %vm169, %v447, %v2888
        %v3179 = vsel %vm169, %v448, %v2890
        %v3180 = vsel %vm169, %v449, %v2892
        %v3181 = vsel %vm996, %v3149, %v2926
        %v3182 = vsel %vm996, %v3150, %v2928
        %v3183 = vsel %vm996, %v3151, %v2930
        %v3184 = vsel %vm996, %v3152, %v2932
        %v3185 = vsel %vm996, %v3153, %v2934
        %v3186 = vsel %vm996, %v3154, %v2936
        %v3187 = vsel %vm996, %v3155, %v2938
        %v3188 = vsel %vm996, %v3156, %v2940
        %v3189 = vsel %vm996, %v3157, %v2942
        %v3190 = vsel %vm996, %v3158, %v2944
        %v3191 = vsel %vm996, %v3159, %v2946
        %v3192 = vsel %vm996, %v3160, %v2948
        %v3193 = vsel %vm996, %v3161, %v2950
        %v3194 = vsel %vm996, %v3162, %v2952
        %v3195 = vsel %vm996, %v3163, %v2954
        %v3196 = vsel %vm996, %v3164, %v2956
        %v3197 = vsel %vm996, %v3165, %v2958
        %v3198 = vsel %vm996, %v3166, %v2960
        %v3199 = vsel %vm996, %v3167, %v2962
        %v3200 = vsel %vm996, %v3168, %v2964
        %v3201 = vsel %vm996, %v3169, %v2966
        %v3202 = vsel %vm996, %v3170, %v2968
        %v3203 = vsel %vm996, %v3171, %v2970
        %v3204 = vsel %vm996, %v3172, %v2972
        %v3205 = vsel %vm996, %v3173, %v2974
        %v3206 = vsel %vm996, %v3174, %v2976
        %v3207 = vsel %vm996, %v3175, %v2978
        %v3208 = vsel %vm996, %v3176, %v2980
        %v3209 = vsel %vm996, %v3177, %v2982
        %v3210 = vsel %vm996, %v3178, %v2984
        %v3211 = vsel %vm996, %v3179, %v2986
        %v3212 = vsel %vm996, %v3180, %v2988
        %v3213 = vsel %vm1029, %v3181, %v3054
        %v3214 = vsel %vm1029, %v3182, %v3056
        %v3215 = vsel %vm1029, %v3183, %v3058
        %v3216 = vsel %vm1029, %v3184, %v3060
        %v3217 = vsel %vm1029, %v3185, %v3062
        %v3218 = vsel %vm1029, %v3186, %v3064
        %v3219 = vsel %vm1029, %v3187, %v3066
        %v3220 = vsel %vm1029, %v3188, %v3068
        %v3221 = vsel %vm1029, %v3189, %v3070
        %v3222 = vsel %vm1029, %v3190, %v3072
        %v3223 = vsel %vm1029, %v3191, %v3074
        %v3224 = vsel %vm1029, %v3192, %v3076
        %v3225 = vsel %vm1029, %v3193, %v3078
        %v3226 = vsel %vm1029, %v3194, %v3080
        %v3227 = vsel %vm1029, %v3195, %v3082
        %v3228 = vsel %vm1029, %v3196, %v3084
        %v3229 = vsel %vm1029, %v3197, %v3086
        %v3230 = vsel %vm1029, %v3198, %v3088
        %v3231 = vsel %vm1029, %v3199, %v3090
        %v3232 = vsel %vm1029, %v3200, %v3092
        %v3233 = vsel %vm1029, %v3201, %v3094
        %v3234 = vsel %vm1029, %v3202, %v3096
        %v3235 = vsel %vm1029, %v3203, %v3098
        %v3236 = vsel %vm1029, %v3204, %v3100
        %v3237 = vsel %vm1029, %v3205, %v3102
        %v3238 = vsel %vm1029, %v3206, %v3104
        %v3239 = vsel %vm1029, %v3207, %v3106
        %v3240 = vsel %vm1029, %v3208, %v3108
        %v3241 = vsel %vm1029, %v3209, %v3110
        %v3242 = vsel %vm1029, %v3210, %v3112
        %v3243 = vsel %vm1029, %v3211, %v3114
        %v3244 = vsel %vm1029, %v3212, %v3116
        %s3245 = scalar_lea.vmem %s1, 96
        %v3246 = vld [vmem:[%s3245] sm:$0xff]
        %v3247 = vld [vmem:[%s3245 + $0x8] sm:$0xff]
        %v3248 = vld [vmem:[%s3245 + $0x10] sm:$0xff]
        %v3249 = vld [vmem:[%s3245 + $0x18] sm:$0xff]
        %v3251 = vsel %vm1069, %v3213, 0
        %v3254 = vsel %vm1069, %v3214, 0
        %v3257 = vsel %vm1069, %v3215, 0
        %v3260 = vsel %vm1069, %v3216, 0
        %v3263 = vsel %vm1069, %v3217, 0
        %v3266 = vsel %vm1069, %v3218, 0
        %v3269 = vsel %vm1069, %v3219, 0
        %v3272 = vsel %vm1069, %v3220, 0
        %v3275 = vsel %vm1069, %v3221, 0
        %v3278 = vsel %vm1069, %v3222, 0
        %v3281 = vsel %vm1069, %v3223, 0
        %v3284 = vsel %vm1069, %v3224, 0
        %v3287 = vsel %vm1069, %v3225, 0
        %v3290 = vsel %vm1069, %v3226, 0
        %v3293 = vsel %vm1069, %v3227, 0
        %v3296 = vsel %vm1069, %v3228, 0
        %v3299 = vsel %vm1069, %v3229, 0
        %v3302 = vsel %vm1069, %v3230, 0
        %v3305 = vsel %vm1069, %v3231, 0
        %v3308 = vsel %vm1069, %v3232, 0
        %v3311 = vsel %vm1069, %v3233, 0
        %v3314 = vsel %vm1069, %v3234, 0
        %v3317 = vsel %vm1069, %v3235, 0
        %v3320 = vsel %vm1069, %v3236, 0
        %v3323 = vsel %vm1069, %v3237, 0
        %v3326 = vsel %vm1069, %v3238, 0
        %v3329 = vsel %vm1069, %v3239, 0
        %v3332 = vsel %vm1069, %v3240, 0
        %v3335 = vsel %vm1069, %v3241, 0
        %v3338 = vsel %vm1069, %v3242, 0
        %v3341 = vsel %vm1069, %v3243, 0
        %v3344 = vsel %vm1069, %v3244, 0
        %3346 = vmatpush.msra.mxu0 0.0
        %3347 = vmatpush.msra.mxu0 0.0
        %3348 = vmatpush.msra.mxu0 0.0
        %3349 = vmatpush.msra.mxu0 0.0
        %3350 = vmatpush.msra.mxu0 0.0
        %3351 = vmatpush.msra.mxu0 0.0
        %3352 = vmatpush.msra.mxu0 0.0
        %3353 = vmatpush.msra.mxu0 0.0
        %3354 = vmatpush.msra.mxu0 0.0
        %3355 = vmatpush.msra.mxu0 0.0
        %3356 = vmatpush.msra.mxu0 0.0
        %3357 = vmatpush.msra.mxu0 0.0
        %3358 = vmatpush.msra.mxu0 %v3249
        %3359 = vmatpush.msra.mxu0 %v3248
        %3360 = vmatpush.msra.mxu0 %v3247
        %3361 = vmatpush.msra.mxu0 %v3246
        %3362 = vmatmul.f32.gmra.mxu0 %v3251
        %v3363 = vpop.f32.mrf.mxu0
        %v3364 = vadd.f32 %v1067, %v3363
        %3365 = vmatmul.f32.gmra.mxu0 %v3254
        %v3366 = vpop.f32.mrf.mxu0
        %v3367 = vadd.f32 %v1067, %v3366
        %3368 = vmatmul.f32.gmra.mxu0 %v3257
        %v3369 = vpop.f32.mrf.mxu0
        %v3370 = vadd.f32 %v1067, %v3369
        %3371 = vmatmul.f32.gmra.mxu0 %v3260
        %v3372 = vpop.f32.mrf.mxu0
        %v3373 = vadd.f32 %v1067, %v3372
        %3374 = vmatmul.f32.gmra.mxu0 %v3263
        %v3375 = vpop.f32.mrf.mxu0
        %v3376 = vadd.f32 %v1067, %v3375
        %3377 = vmatmul.f32.gmra.mxu0 %v3266
        %v3378 = vpop.f32.mrf.mxu0
        %v3379 = vadd.f32 %v1067, %v3378
        %3380 = vmatmul.f32.gmra.mxu0 %v3269
        %v3381 = vpop.f32.mrf.mxu0
        %v3382 = vadd.f32 %v1067, %v3381
        %3383 = vmatmul.f32.gmra.mxu0 %v3272
        %v3384 = vpop.f32.mrf.mxu0
        %v3385 = vadd.f32 %v1067, %v3384
        %3386 = vmatmul.f32.gmra.mxu0 %v3275
        %v3387 = vpop.f32.mrf.mxu0
        %v3388 = vadd.f32 %v1067, %v3387
        %3389 = vmatmul.f32.gmra.mxu0 %v3278
        %v3390 = vpop.f32.mrf.mxu0
        %v3391 = vadd.f32 %v1067, %v3390
        %3392 = vmatmul.f32.gmra.mxu0 %v3281
        %v3393 = vpop.f32.mrf.mxu0
        %v3394 = vadd.f32 %v1067, %v3393
        %3395 = vmatmul.f32.gmra.mxu0 %v3284
        %v3396 = vpop.f32.mrf.mxu0
        %v3397 = vadd.f32 %v1067, %v3396
        %3398 = vmatmul.f32.gmra.mxu0 %v3287
        %v3399 = vpop.f32.mrf.mxu0
        %v3400 = vadd.f32 %v1067, %v3399
        %3401 = vmatmul.f32.gmra.mxu0 %v3290
        %v3402 = vpop.f32.mrf.mxu0
        %v3403 = vadd.f32 %v1067, %v3402
        %3404 = vmatmul.f32.gmra.mxu0 %v3293
        %v3405 = vpop.f32.mrf.mxu0
        %v3406 = vadd.f32 %v1067, %v3405
        %3407 = vmatmul.f32.gmra.mxu0 %v3296
        %v3408 = vpop.f32.mrf.mxu0
        %v3409 = vadd.f32 %v1067, %v3408
        %3410 = vmatmul.f32.gmra.mxu0 %v3299
        %v3411 = vpop.f32.mrf.mxu0
        %v3412 = vadd.f32 %v1067, %v3411
        %3413 = vmatmul.f32.gmra.mxu0 %v3302
        %v3414 = vpop.f32.mrf.mxu0
        %v3415 = vadd.f32 %v1067, %v3414
        %3416 = vmatmul.f32.gmra.mxu0 %v3305
        %v3417 = vpop.f32.mrf.mxu0
        %v3418 = vadd.f32 %v1067, %v3417
        %3419 = vmatmul.f32.gmra.mxu0 %v3308
        %v3420 = vpop.f32.mrf.mxu0
        %v3421 = vadd.f32 %v1067, %v3420
        %3422 = vmatmul.f32.gmra.mxu0 %v3311
        %v3423 = vpop.f32.mrf.mxu0
        %v3424 = vadd.f32 %v1067, %v3423
        %3425 = vmatmul.f32.gmra.mxu0 %v3314
        %v3426 = vpop.f32.mrf.mxu0
        %v3427 = vadd.f32 %v1067, %v3426
        %3428 = vmatmul.f32.gmra.mxu0 %v3317
        %v3429 = vpop.f32.mrf.mxu0
        %v3430 = vadd.f32 %v1067, %v3429
        %3431 = vmatmul.f32.gmra.mxu0 %v3320
        %v3432 = vpop.f32.mrf.mxu0
        %v3433 = vadd.f32 %v1067, %v3432
        %3434 = vmatmul.f32.gmra.mxu0 %v3323
        %v3435 = vpop.f32.mrf.mxu0
        %v3436 = vadd.f32 %v1067, %v3435
        %3437 = vmatmul.f32.gmra.mxu0 %v3326
        %v3438 = vpop.f32.mrf.mxu0
        %v3439 = vadd.f32 %v1067, %v3438
        %3440 = vmatmul.f32.gmra.mxu0 %v3329
        %v3441 = vpop.f32.mrf.mxu0
        %v3442 = vadd.f32 %v1067, %v3441
        %3443 = vmatmul.f32.gmra.mxu0 %v3332
        %v3444 = vpop.f32.mrf.mxu0
        %v3445 = vadd.f32 %v1067, %v3444
        %3446 = vmatmul.f32.gmra.mxu0 %v3335
        %v3447 = vpop.f32.mrf.mxu0
        %v3448 = vadd.f32 %v1067, %v3447
        %3449 = vmatmul.f32.gmra.mxu0 %v3338
        %v3450 = vpop.f32.mrf.mxu0
        %v3451 = vadd.f32 %v1067, %v3450
        %3452 = vmatmul.f32.gmra.mxu0 %v3341
        %v3453 = vpop.f32.mrf.mxu0
        %v3454 = vadd.f32 %v1067, %v3453
        %3455 = vmatmul.f32.gmra.mxu0 %v3344
        %v3456 = vpop.f32.mrf.mxu0
        %v3457 = vadd.f32 %v1067, %v3456
        %3458 = vdwg.mxu0
        %3491 = vrot.lane.b32.xlu0 %v3364, 8
        %v3492 = vpop.permute.xlu0 %3491
        %3493 = vrot.lane.b32.xlu0 %v3367, 8
        %v3494 = vpop.permute.xlu0 %3493
        %3495 = vrot.lane.b32.xlu0 %v3370, 8
        %v3496 = vpop.permute.xlu0 %3495
        %3497 = vrot.lane.b32.xlu0 %v3373, 8
        %v3498 = vpop.permute.xlu0 %3497
        %3499 = vrot.lane.b32.xlu0 %v3376, 8
        %v3500 = vpop.permute.xlu0 %3499
        %3501 = vrot.lane.b32.xlu0 %v3379, 8
        %v3502 = vpop.permute.xlu0 %3501
        %3503 = vrot.lane.b32.xlu0 %v3382, 8
        %v3504 = vpop.permute.xlu0 %3503
        %3505 = vrot.lane.b32.xlu0 %v3385, 8
        %v3506 = vpop.permute.xlu0 %3505
        %3507 = vrot.lane.b32.xlu0 %v3388, 8
        %v3508 = vpop.permute.xlu0 %3507
        %3509 = vrot.lane.b32.xlu0 %v3391, 8
        %v3510 = vpop.permute.xlu0 %3509
        %3511 = vrot.lane.b32.xlu0 %v3394, 8
        %v3512 = vpop.permute.xlu0 %3511
        %3513 = vrot.lane.b32.xlu0 %v3397, 8
        %v3514 = vpop.permute.xlu0 %3513
        %3515 = vrot.lane.b32.xlu0 %v3400, 8
        %v3516 = vpop.permute.xlu0 %3515
        %3517 = vrot.lane.b32.xlu0 %v3403, 8
        %v3518 = vpop.permute.xlu0 %3517
        %3519 = vrot.lane.b32.xlu0 %v3406, 8
        %v3520 = vpop.permute.xlu0 %3519
        %3521 = vrot.lane.b32.xlu0 %v3409, 8
        %v3522 = vpop.permute.xlu0 %3521
        %3523 = vrot.lane.b32.xlu0 %v3412, 8
        %v3524 = vpop.permute.xlu0 %3523
        %3525 = vrot.lane.b32.xlu0 %v3415, 8
        %v3526 = vpop.permute.xlu0 %3525
        %3527 = vrot.lane.b32.xlu0 %v3418, 8
        %v3528 = vpop.permute.xlu0 %3527
        %3529 = vrot.lane.b32.xlu0 %v3421, 8
        %v3530 = vpop.permute.xlu0 %3529
        %3531 = vrot.lane.b32.xlu0 %v3424, 8
        %v3532 = vpop.permute.xlu0 %3531
        %3533 = vrot.lane.b32.xlu0 %v3427, 8
        %v3534 = vpop.permute.xlu0 %3533
        %3535 = vrot.lane.b32.xlu0 %v3430, 8
        %v3536 = vpop.permute.xlu0 %3535
        %3537 = vrot.lane.b32.xlu0 %v3433, 8
        %v3538 = vpop.permute.xlu0 %3537
        %3539 = vrot.lane.b32.xlu0 %v3436, 8
        %v3540 = vpop.permute.xlu0 %3539
        %3541 = vrot.lane.b32.xlu0 %v3439, 8
        %v3542 = vpop.permute.xlu0 %3541
        %3543 = vrot.lane.b32.xlu0 %v3442, 8
        %v3544 = vpop.permute.xlu0 %3543
        %3545 = vrot.lane.b32.xlu0 %v3445, 8
        %v3546 = vpop.permute.xlu0 %3545
        %3547 = vrot.lane.b32.xlu0 %v3448, 8
        %v3548 = vpop.permute.xlu0 %3547
        %3549 = vrot.lane.b32.xlu0 %v3451, 8
        %v3550 = vpop.permute.xlu0 %3549
        %3551 = vrot.lane.b32.xlu0 %v3454, 8
        %v3552 = vpop.permute.xlu0 %3551
        %3553 = vrot.lane.b32.xlu0 %v3457, 8
        %v3554 = vpop.permute.xlu0 %3553
        %3587 = vst.msk [vmem:[%s2796] sm:$0xff] %vm2101, %v3492
        %3588 = vst.msk [vmem:[%s2796 + $0x8] sm:$0xff] %vm2101, %v3494
        %3589 = vst.msk [vmem:[%s2796 + $0x20] sm:$0xff] %vm2101, %v3496
        %3590 = vst.msk [vmem:[%s2796 + $0x28] sm:$0xff] %vm2101, %v3498
        %3591 = vst.msk [vmem:[%s2796 + $0x40] sm:$0xff] %vm2101, %v3500
        %3592 = vst.msk [vmem:[%s2796 + $0x48] sm:$0xff] %vm2101, %v3502
        %3593 = vst.msk [vmem:[%s2796 + $0x60] sm:$0xff] %vm2101, %v3504
        %3594 = vst.msk [vmem:[%s2796 + $0x68] sm:$0xff] %vm2101, %v3506
        %3595 = vst.msk [vmem:[%s2796 + $0x80] sm:$0xff] %vm2101, %v3508
        %3596 = vst.msk [vmem:[%s2796 + $0x88] sm:$0xff] %vm2101, %v3510
        %3597 = vst.msk [vmem:[%s2796 + $0xa0] sm:$0xff] %vm2101, %v3512
        %3598 = vst.msk [vmem:[%s2796 + $0xa8] sm:$0xff] %vm2101, %v3514
        %3599 = vst.msk [vmem:[%s2796 + $0xc0] sm:$0xff] %vm2101, %v3516
        %3600 = vst.msk [vmem:[%s2796 + $0xc8] sm:$0xff] %vm2101, %v3518
        %3601 = vst.msk [vmem:[%s2796 + $0xe0] sm:$0xff] %vm2101, %v3520
        %3602 = vst.msk [vmem:[%s2796 + $0xe8] sm:$0xff] %vm2101, %v3522
        %3603 = vst.msk [vmem:[%s2796 + $0x100] sm:$0xff] %vm2101, %v3524
        %3604 = vst.msk [vmem:[%s2796 + $0x108] sm:$0xff] %vm2101, %v3526
        %3605 = vst.msk [vmem:[%s2796 + $0x120] sm:$0xff] %vm2101, %v3528
        %3606 = vst.msk [vmem:[%s2796 + $0x128] sm:$0xff] %vm2101, %v3530
        %3607 = vst.msk [vmem:[%s2796 + $0x140] sm:$0xff] %vm2101, %v3532
        %3608 = vst.msk [vmem:[%s2796 + $0x148] sm:$0xff] %vm2101, %v3534
        %3609 = vst.msk [vmem:[%s2796 + $0x160] sm:$0xff] %vm2101, %v3536
        %3610 = vst.msk [vmem:[%s2796 + $0x168] sm:$0xff] %vm2101, %v3538
        %3611 = vst.msk [vmem:[%s2796 + $0x180] sm:$0xff] %vm2101, %v3540
        %3612 = vst.msk [vmem:[%s2796 + $0x188] sm:$0xff] %vm2101, %v3542
        %3613 = vst.msk [vmem:[%s2796 + $0x1a0] sm:$0xff] %vm2101, %v3544
        %3614 = vst.msk [vmem:[%s2796 + $0x1a8] sm:$0xff] %vm2101, %v3546
        %3615 = vst.msk [vmem:[%s2796 + $0x1c0] sm:$0xff] %vm2101, %v3548
        %3616 = vst.msk [vmem:[%s2796 + $0x1c8] sm:$0xff] %vm2101, %v3550
        %3617 = vst.msk [vmem:[%s2796 + $0x1e0] sm:$0xff] %vm2101, %v3552
        %3618 = vst.msk [vmem:[%s2796 + $0x1e8] sm:$0xff] %vm2101, %v3554
        %s3619 = sand.u32 %s93, 1
        %s3620 = scalar_lea.sflag [#allocation4], %s3619
        %s3621 = sand.u32 %s93, 1
        %s3622 = smul.addr %s3621, 512
        %s3623 = scalar_lea.vmem [#allocation3], %s3622
        // Predicated region
        $region33: #{tpu_custom_call.1} parent=31 // pred_check
          %p3624 = pneg %p103
        $region34: #{tpu_custom_call.1} parent=31 // pred_check_branch
          %3626 = sbr.rel (%p3624) target = $region36
        $region35: #{tpu_custom_call.1} parent=31 // pred_region
          %3628 = vsyncadd %s3620, 0
          %s3629 = smul.addr %s17, 64
          %s3630 = smul.addr %s3629, 8
          %s3631 = scalar_lea.hbm %s3, %s3630
          %s3632 = sshll.u32 %s3623, 4
          %s3633 = int_to_ptr.vmem [resolvable:$true] %s3632
          %s3634 = sshll.u32 %s3631, 4
          %s3635 = int_to_ptr.hbm [resolvable:$true] %s3634
          %3640 = dma.vmem_to_hbm [thread:$0]  %s3633, 8192, %s3635, %s3620, 128, 128, 8
        $region36: #{tpu_custom_call.1} parent=31 // pred_fallthru
          _
      $region32: #{tpu_custom_call.1} parent=5 // pred_fallthru
        _
      %p3641 = scmp.le.s32.totalorder 2, %s12
      // Predicated region
      $region37: #{tpu_custom_call.1} parent=5 // pred_check
        %p3642 = pneg %p3641
      $region38: #{tpu_custom_call.1} parent=5 // pred_check_branch
        %3644 = sbr.rel (%p3642) target = $region40
      $region39: #{tpu_custom_call.1} parent=5 // pred_region
        %s3645 = ssub.s32 %s12, 2
        // Predicated region
        $region41: #{tpu_custom_call.1} parent=39 // pred_check
          %p3646 = pneg %p109
        $region42: #{tpu_custom_call.1} parent=39 // pred_check_branch
          %3648 = sbr.rel (%p3646) target = $region44
        $region43: #{tpu_custom_call.1} parent=39 // pred_region
          %s3649 = sand.u32 %s94, 1
          %s3650 = scalar_lea.sflag [#allocation4], %s3649
          %s3651 = sand.u32 %s94, 1
          %s3652 = smul.addr %s3651, 512
          %s3653 = scalar_lea.vmem [#allocation3], %s3652
          %3655 = dma.done %s3650, 8192
        $region44: #{tpu_custom_call.1} parent=39 // pred_fallthru
          _
      $region40: #{tpu_custom_call.1} parent=5 // pred_fallthru
        _
    $region6: #{tpu_custom_call.1} parent=1 // loop_footer
      %s16 = sadd.s32 1, %s12
    $region7: #{tpu_custom_call.1} parent=1 // loop_footer_branch
      %11 = sbr.rel target = $region3
    $region8: #{tpu_custom_call.1} parent=1 // loop_exit
      _
    %3656 = vsyncpa [#allocation4], 1
    %s3657 = scalar_lea.sflag [#allocation4], 1
    %3658 = vsyncpa %s3657, 1

</llo_original>
